<compile_context>
chip_gen: v7x
topology: tpu7x:2x2x1
jax: 0.10.0
libtpu: 0.0.40
codegen_flags: <defaults>
</compile_context>

<pallas_src>
import numpy as np
import jax
import jax.numpy as jnp
from jax import lax
from jax.experimental import pallas as pl
from jax.experimental.pallas import tpu as pltpu

INF = 1e30   # finite sentinel: survives add/sub/min inside the scan without NaNs
BT = 8       # batch elements packed per sublane tile


def _round_up(v, m):
    return (v + m - 1) // m * m


def dtw_dp_kernel(d_ref, cost_ref, prev_ref):
    # Per grid step (one batch tile x one row tile):
    #   d_ref:    [TILE_N, BT, Mp]  pairwise distances, batch packed on sublanes
    #   cost_ref: [TILE_N, BT, Mp]  accumulated DTW cost rows (output)
    #   prev_ref: [BT, Mp]          previous DP row, carried across row tiles
    tile_n, bt, mp = d_ref.shape
    r = pl.program_id(1)

    @pl.when(r == 0)
    def _():
        prev_ref[...] = jnp.full((bt, mp), INF, dtype=jnp.float32)

    # Hoisted loop invariants: one lane iota, one mask per scan shift.
    lane = lax.broadcasted_iota(jnp.int32, (bt, mp), 1)
    mask1 = lane < 1
    shift_masks = []
    s = 1
    while s < mp:
        shift_masks.append((s, lane < s))
        s *= 2

    def shift_right(v, s, mask, fill):
        # v shifted right by s lanes; first s lanes <- fill.  pltpu.roll runs
        # in the XLU slot; the masked select is a cheap VPU op.
        return jnp.where(mask, fill, pltpu.roll(v, shift=s, axis=1))

    def row_body(i, prev):
        d_row = d_ref[i]                                   # [BT, Mp]

        # DTW row recurrence cost[i,j] = d[i,j] + min(up, left, diag), resolved
        # with a min-plus scan along lanes (each sublane = one batch element):
        #   a[j]   = min(cost[i-1, j], cost[i-1, j-1])   (virtual cost[-1,-1]=0)
        #   row[j] = S[j] + min_{k<=j}(a[k] - S[k-1]),   S = cumsum(d_row)
        first_row = jnp.logical_and(r == 0, i == 0)
        left_fill = jnp.where(first_row, 0.0, INF)
        a = jnp.minimum(prev, shift_right(prev, 1, mask1, left_fill))

        s_cum = d_row                                      # inclusive cumsum
        for s, m in shift_masks:
            s_cum = s_cum + shift_right(s_cum, s, m, 0.0)
        s_prev = shift_right(s_cum, 1, mask1, 0.0)

        t = a - s_prev                                     # inclusive cummin
        for s, m in shift_masks:
            t = jnp.minimum(t, shift_right(t, s, m, INF))

        row = s_cum + t
        cost_ref[i] = row                                  # full-vreg unmasked store
        return row

    prev_final = lax.fori_loop(0, tile_n, row_body, prev_ref[...], unroll=8)
    prev_ref[...] = prev_final


def dtw_dp(input1, input2):
    x = input1.astype(jnp.float32)          # [B, N, D]
    y = input2.astype(jnp.float32)          # [B, M, D]
    B, N, D = x.shape
    M = y.shape[1]

    # Pairwise squared-Euclidean distances as one dense batched GEMM — fully
    # hoisted off the serial DP path (runs at full MXU rate in XLA; the extra
    # HBM round-trip of d hides under the XLU/VPU-bound scan in the kernel).
    xx = jnp.sum(x * x, axis=-1)[:, :, None]                       # [B, N, 1]
    yy = jnp.sum(y * y, axis=-1)[:, None, :]                       # [B, 1, M]
    xy = jnp.einsum('bnd,bmd->bnm', x, y,
                    precision=lax.Precision.HIGHEST,
                    preferred_element_type=jnp.float32)
    d = xx + yy - 2.0 * xy                                         # [B, N, M]

    # Pad M to the lane tile; pick a row tile (multiple of 8) small enough that
    # the double-buffered in/out blocks stay well under scoped VMEM limits.
    Mp = _round_up(M, 128)
    tn_cap = max(8, ((12 * 1024 * 1024) // (16 * BT * Mp)) // 8 * 8)
    tile_n = max(8, min(128, _round_up(N, 8), tn_cap))
    Np = _round_up(N, tile_n)
    Bp = _round_up(B, BT)
    nb, nrt = Bp // BT, Np // tile_n

    # Zero padding is inert: the DP only looks left/up, so padded rows/columns
    # never influence the valid [B, N, M] region (sliced off below); padded
    # batch elements are independent sublanes.
    d = jnp.pad(d, ((0, Bp - B), (0, Np - N), (0, Mp - M)))

    # Pack batch onto the sublane axis: [Bp, Np, Mp] -> [nb, Np, BT, Mp].
    d = d.reshape(nb, BT, Np, Mp).transpose(0, 2, 1, 3)

    out = pl.pallas_call(
        dtw_dp_kernel,
        out_shape=jax.ShapeDtypeStruct((nb, Np, BT, Mp), jnp.float32),
        grid=(nb, nrt),
        in_specs=[pl.BlockSpec((None, tile_n, BT, Mp), lambda b, r: (b, r, 0, 0))],
        out_specs=pl.BlockSpec((None, tile_n, BT, Mp), lambda b, r: (b, r, 0, 0)),
        scratch_shapes=[pltpu.VMEM((BT, Mp), jnp.float32)],
        compiler_params=pltpu.CompilerParams(
            dimension_semantics=("parallel", "arbitrary"),
            vmem_limit_bytes=32 * 1024 * 1024),
    )(d)

    # Unpack batch from sublanes and slice off padding.
    out = out.transpose(0, 2, 1, 3).reshape(Bp, Np, Mp)
    return out[:B, :N, :M]


def dtw_ref(x, y):
    """Pure numpy reference of the same DTW forward."""
    x = np.asarray(x, np.float64)
    y = np.asarray(y, np.float64)
    B, N, _ = x.shape
    M = y.shape[1]
    d = (np.sum(x * x, -1)[:, :, None] + np.sum(y * y, -1)[:, None, :]
         - 2.0 * np.einsum('bnd,bmd->bnm', x, y))
    cost = np.zeros((B, N, M))
    for b in range(B):
        for i in range(N):
            for j in range(M):
                if i == 0 and j == 0:
                    cands = [0.0]
                else:
                    cands = []
                    if i > 0:
                        cands.append(cost[b, i - 1, j])
                    if j > 0:
                        cands.append(cost[b, i, j - 1])
                    if i > 0 and j > 0:
                        cands.append(cost[b, i - 1, j - 1])
                cost[b, i, j] = d[b, i, j] + min(cands)
    return cost.astype(np.float32)


if __name__ == "__main__":
    B, N, M, D = 2, 8, 8, 32
    key = jax.random.PRNGKey(0)
    k1, k2 = jax.random.split(key)
    input1 = jax.random.normal(k1, (B, N, D), dtype=jnp.float32)
    input2 = jax.random.normal(k2, (B, M, D), dtype=jnp.float32)

    out = dtw_dp(input1, input2)
    out = jax.block_until_ready(out)

    ref = dtw_ref(input1, input2)
    np.testing.assert_allclose(np.asarray(out), ref, rtol=1e-4, atol=1e-2)
    print("KERNEL_OK")
</pallas_src>

<mosaic_0001>
module attributes {stable_mosaic.version = 11 : i64} {
  func.func @dtw_dp_kernel(%arg0: i32, %arg1: i32, %arg2: memref<1x8x8x128xf32, #tpu.memory_space<vmem>>, %arg3: memref<1x8x8x128xf32, #tpu.memory_space<vmem>>, %arg4: memref<8x128xf32, #tpu.memory_space<vmem>>) attributes {dimension_semantics = [#tpu.dimension_semantics<parallel>, #tpu.dimension_semantics<arbitrary>], iteration_bounds = array<i64: 1, 1>, scalar_prefetch = 0 : i64, scratch_operands = 1 : i64, tpu.core_type = #tpu.core_type<tc>, window_params = [{transform_indices = @transform_0, window_bounds = array<i64: 1, 8, 8, 128>}, {transform_indices = @transform_1, window_bounds = array<i64: 1, 8, 8, 128>}]} {
    %c0_i32 = arith.constant 0 : i32
    %0 = arith.cmpi eq, %arg1, %c0_i32 : i32
    %1 = arith.extui %0 : i1 to i32
    %c0_i32_0 = arith.constant 0 : i32
    %2 = arith.cmpi ne, %1, %c0_i32_0 : i32
    scf.if %2 {
      %cst_337 = arith.constant 1.000000e+30 : f32
      %630 = vector.broadcast %cst_337 : f32 to vector<8x128xf32>
      %c0_338 = arith.constant 0 : index
      %c0_339 = arith.constant 0 : index
      %631 = vector.load %arg4[%c0_338, %c0_339] : memref<8x128xf32, #tpu.memory_space<vmem>>, vector<8x128xf32>
      tpu.vector_store %arg4[%c0_338, %c0_339], %630 {strides = array<i32>} : memref<8x128xf32, #tpu.memory_space<vmem>>, vector<8x128xf32>,
    } else {
    }
    %3 = tpu.iota {dimensions = array<i32: 1>} : vector<8x128xi32>
    %c1_i32 = arith.constant 1 : i32
    %4 = vector.broadcast %c1_i32 : i32 to vector<8x128xi32>
    %5 = arith.cmpi slt, %3, %4 : vector<8x128xi32>
    %c1_i32_1 = arith.constant 1 : i32
    %6 = vector.broadcast %c1_i32_1 : i32 to vector<8x128xi32>
    %7 = arith.cmpi slt, %3, %6 : vector<8x128xi32>
    %c2_i32 = arith.constant 2 : i32
    %8 = vector.broadcast %c2_i32 : i32 to vector<8x128xi32>
    %9 = arith.cmpi slt, %3, %8 : vector<8x128xi32>
    %c4_i32 = arith.constant 4 : i32
    %10 = vector.broadcast %c4_i32 : i32 to vector<8x128xi32>
    %11 = arith.cmpi slt, %3, %10 : vector<8x128xi32>
    %c8_i32 = arith.constant 8 : i32
    %12 = vector.broadcast %c8_i32 : i32 to vector<8x128xi32>
    %13 = arith.cmpi slt, %3, %12 : vector<8x128xi32>
    %c16_i32 = arith.constant 16 : i32
    %14 = vector.broadcast %c16_i32 : i32 to vector<8x128xi32>
    %15 = arith.cmpi slt, %3, %14 : vector<8x128xi32>
    %c32_i32 = arith.constant 32 : i32
    %16 = vector.broadcast %c32_i32 : i32 to vector<8x128xi32>
    %17 = arith.cmpi slt, %3, %16 : vector<8x128xi32>
    %c64_i32 = arith.constant 64 : i32
    %18 = vector.broadcast %c64_i32 : i32 to vector<8x128xi32>
    %19 = arith.cmpi slt, %3, %18 : vector<8x128xi32>
    %c0 = arith.constant 0 : index
    %c0_2 = arith.constant 0 : index
    %20 = vector.load %arg4[%c0, %c0_2] : memref<8x128xf32, #tpu.memory_space<vmem>>, vector<8x128xf32>
    %c0_i32_3 = arith.constant 0 : i32
    %c0_4 = arith.constant 0 : index
    %21 = arith.index_cast %c0_i32_3 : i32 to index
    %c0_5 = arith.constant 0 : index
    %c0_6 = arith.constant 0 : index
    %22 = vector.load %arg2[%c0_4, %21, %c0_5, %c0_6] : memref<1x8x8x128xf32, #tpu.memory_space<vmem>>, vector<1x1x8x128xf32>
    %23 = vector.shape_cast %22 : vector<1x1x8x128xf32> to vector<8x128xf32>
    %c0_i32_7 = arith.constant 0 : i32
    %24 = arith.cmpi eq, %arg1, %c0_i32_7 : i32
    %c0_i32_8 = arith.constant 0 : i32
    %25 = arith.cmpi eq, %c0_i32_3, %c0_i32_8 : i32
    %26 = arith.andi %24, %25 : i1
    %cst = arith.constant 0.000000e+00 : f32
    %cst_9 = arith.constant 1.000000e+30 : f32
    %27 = arith.select %26, %cst, %cst_9 : f32
    %c1_i32_10 = arith.constant 1 : i32
    %28 = tpu.dynamic_rotate %20 by %c1_i32_10 dim 1 : vector<8x128xf32>, i32 -> vector<8x128xf32>
    %29 = vector.broadcast %27 : f32 to vector<8x128xf32>
    %30 = arith.select %5, %29, %28 : vector<8x128xi1>, vector<8x128xf32>
    %31 = arith.minimumf %20, %30 : vector<8x128xf32>
    %c1_i32_11 = arith.constant 1 : i32
    %32 = tpu.dynamic_rotate %23 by %c1_i32_11 dim 1 : vector<8x128xf32>, i32 -> vector<8x128xf32>
    %cst_12 = arith.constant 0.000000e+00 : f32
    %33 = vector.broadcast %cst_12 : f32 to vector<8x128xf32>
    %34 = arith.select %7, %33, %32 : vector<8x128xi1>, vector<8x128xf32>
    %35 = arith.addf %23, %34 : vector<8x128xf32>
    %c2_i32_13 = arith.constant 2 : i32
    %36 = tpu.dynamic_rotate %35 by %c2_i32_13 dim 1 : vector<8x128xf32>, i32 -> vector<8x128xf32>
    %cst_14 = arith.constant 0.000000e+00 : f32
    %37 = vector.broadcast %cst_14 : f32 to vector<8x128xf32>
    %38 = arith.select %9, %37, %36 : vector<8x128xi1>, vector<8x128xf32>
    %39 = arith.addf %35, %38 : vector<8x128xf32>
    %c4_i32_15 = arith.constant 4 : i32
    %40 = tpu.dynamic_rotate %39 by %c4_i32_15 dim 1 : vector<8x128xf32>, i32 -> vector<8x128xf32>
    %cst_16 = arith.constant 0.000000e+00 : f32
    %41 = vector.broadcast %cst_16 : f32 to vector<8x128xf32>
    %42 = arith.select %11, %41, %40 : vector<8x128xi1>, vector<8x128xf32>
    %43 = arith.addf %39, %42 : vector<8x128xf32>
    %c8_i32_17 = arith.constant 8 : i32
    %44 = tpu.dynamic_rotate %43 by %c8_i32_17 dim 1 : vector<8x128xf32>, i32 -> vector<8x128xf32>
    %cst_18 = arith.constant 0.000000e+00 : f32
    %45 = vector.broadcast %cst_18 : f32 to vector<8x128xf32>
    %46 = arith.select %13, %45, %44 : vector<8x128xi1>, vector<8x128xf32>
    %47 = arith.addf %43, %46 : vector<8x128xf32>
    %c16_i32_19 = arith.constant 16 : i32
    %48 = tpu.dynamic_rotate %47 by %c16_i32_19 dim 1 : vector<8x128xf32>, i32 -> vector<8x128xf32>
    %cst_20 = arith.constant 0.000000e+00 : f32
    %49 = vector.broadcast %cst_20 : f32 to vector<8x128xf32>
    %50 = arith.select %15, %49, %48 : vector<8x128xi1>, vector<8x128xf32>
    %51 = arith.addf %47, %50 : vector<8x128xf32>
    %c32_i32_21 = arith.constant 32 : i32
    %52 = tpu.dynamic_rotate %51 by %c32_i32_21 dim 1 : vector<8x128xf32>, i32 -> vector<8x128xf32>
    %cst_22 = arith.constant 0.000000e+00 : f32
    %53 = vector.broadcast %cst_22 : f32 to vector<8x128xf32>
    %54 = arith.select %17, %53, %52 : vector<8x128xi1>, vector<8x128xf32>
    %55 = arith.addf %51, %54 : vector<8x128xf32>
    %c64_i32_23 = arith.constant 64 : i32
    %56 = tpu.dynamic_rotate %55 by %c64_i32_23 dim 1 : vector<8x128xf32>, i32 -> vector<8x128xf32>
    %cst_24 = arith.constant 0.000000e+00 : f32
    %57 = vector.broadcast %cst_24 : f32 to vector<8x128xf32>
    %58 = arith.select %19, %57, %56 : vector<8x128xi1>, vector<8x128xf32>
    %59 = arith.addf %55, %58 : vector<8x128xf32>
    %c1_i32_25 = arith.constant 1 : i32
    %60 = tpu.dynamic_rotate %59 by %c1_i32_25 dim 1 : vector<8x128xf32>, i32 -> vector<8x128xf32>
    %cst_26 = arith.constant 0.000000e+00 : f32
    %61 = vector.broadcast %cst_26 : f32 to vector<8x128xf32>
    %62 = arith.select %5, %61, %60 : vector<8x128xi1>, vector<8x128xf32>
    %63 = arith.subf %31, %62 : vector<8x128xf32>
    %c1_i32_27 = arith.constant 1 : i32
    %64 = tpu.dynamic_rotate %63 by %c1_i32_27 dim 1 : vector<8x128xf32>, i32 -> vector<8x128xf32>
    %cst_28 = arith.constant 1.000000e+30 : f32
    %65 = vector.broadcast %cst_28 : f32 to vector<8x128xf32>
    %66 = arith.select %7, %65, %64 : vector<8x128xi1>, vector<8x128xf32>
    %67 = arith.minimumf %63, %66 : vector<8x128xf32>
    %c2_i32_29 = arith.constant 2 : i32
    %68 = tpu.dynamic_rotate %67 by %c2_i32_29 dim 1 : vector<8x128xf32>, i32 -> vector<8x128xf32>
    %cst_30 = arith.constant 1.000000e+30 : f32
    %69 = vector.broadcast %cst_30 : f32 to vector<8x128xf32>
    %70 = arith.select %9, %69, %68 : vector<8x128xi1>, vector<8x128xf32>
    %71 = arith.minimumf %67, %70 : vector<8x128xf32>
    %c4_i32_31 = arith.constant 4 : i32
    %72 = tpu.dynamic_rotate %71 by %c4_i32_31 dim 1 : vector<8x128xf32>, i32 -> vector<8x128xf32>
    %cst_32 = arith.constant 1.000000e+30 : f32
    %73 = vector.broadcast %cst_32 : f32 to vector<8x128xf32>
    %74 = arith.select %11, %73, %72 : vector<8x128xi1>, vector<8x128xf32>
    %75 = arith.minimumf %71, %74 : vector<8x128xf32>
    %c8_i32_33 = arith.constant 8 : i32
    %76 = tpu.dynamic_rotate %75 by %c8_i32_33 dim 1 : vector<8x128xf32>, i32 -> vector<8x128xf32>
    %cst_34 = arith.constant 1.000000e+30 : f32
    %77 = vector.broadcast %cst_34 : f32 to vector<8x128xf32>
    %78 = arith.select %13, %77, %76 : vector<8x128xi1>, vector<8x128xf32>
    %79 = arith.minimumf %75, %78 : vector<8x128xf32>
    %c16_i32_35 = arith.constant 16 : i32
    %80 = tpu.dynamic_rotate %79 by %c16_i32_35 dim 1 : vector<8x128xf32>, i32 -> vector<8x128xf32>
    %cst_36 = arith.constant 1.000000e+30 : f32
    %81 = vector.broadcast %cst_36 : f32 to vector<8x128xf32>
    %82 = arith.select %15, %81, %80 : vector<8x128xi1>, vector<8x128xf32>
    %83 = arith.minimumf %79, %82 : vector<8x128xf32>
    %c32_i32_37 = arith.constant 32 : i32
    %84 = tpu.dynamic_rotate %83 by %c32_i32_37 dim 1 : vector<8x128xf32>, i32 -> vector<8x128xf32>
    %cst_38 = arith.constant 1.000000e+30 : f32
    %85 = vector.broadcast %cst_38 : f32 to vector<8x128xf32>
    %86 = arith.select %17, %85, %84 : vector<8x128xi1>, vector<8x128xf32>
    %87 = arith.minimumf %83, %86 : vector<8x128xf32>
    %c64_i32_39 = arith.constant 64 : i32
    %88 = tpu.dynamic_rotate %87 by %c64_i32_39 dim 1 : vector<8x128xf32>, i32 -> vector<8x128xf32>
    %cst_40 = arith.constant 1.000000e+30 : f32
    %89 = vector.broadcast %cst_40 : f32 to vector<8x128xf32>
    %90 = arith.select %19, %89, %88 : vector<8x128xi1>, vector<8x128xf32>
    %91 = arith.minimumf %87, %90 : vector<8x128xf32>
    %92 = arith.addf %59, %91 : vector<8x128xf32>
    %c0_41 = arith.constant 0 : index
    %93 = arith.index_cast %c0_i32_3 : i32 to index
    %c0_42 = arith.constant 0 : index
    %c0_43 = arith.constant 0 : index
    %94 = vector.load %arg3[%c0_41, %93, %c0_42, %c0_43] : memref<1x8x8x128xf32, #tpu.memory_space<vmem>>, vector<1x1x8x128xf32>
    %95 = vector.shape_cast %94 : vector<1x1x8x128xf32> to vector<8x128xf32>
    %96 = vector.shape_cast %92 : vector<8x128xf32> to vector<1x1x8x128xf32>
    tpu.vector_store %arg3[%c0_41, %93, %c0_42, %c0_43], %96 {strides = array<i32>} : memref<1x8x8x128xf32, #tpu.memory_space<vmem>>, vector<1x1x8x128xf32>,
    %c1_i32_44 = arith.constant 1 : i32
    %c0_45 = arith.constant 0 : index
    %97 = arith.index_cast %c1_i32_44 : i32 to index
    %c0_46 = arith.constant 0 : index
    %c0_47 = arith.constant 0 : index
    %98 = vector.load %arg2[%c0_45, %97, %c0_46, %c0_47] : memref<1x8x8x128xf32, #tpu.memory_space<vmem>>, vector<1x1x8x128xf32>
    %99 = vector.shape_cast %98 : vector<1x1x8x128xf32> to vector<8x128xf32>
    %c0_i32_48 = arith.constant 0 : i32
    %100 = arith.cmpi eq, %arg1, %c0_i32_48 : i32
    %c0_i32_49 = arith.constant 0 : i32
    %101 = arith.cmpi eq, %c1_i32_44, %c0_i32_49 : i32
    %102 = arith.andi %100, %101 : i1
    %cst_50 = arith.constant 0.000000e+00 : f32
    %cst_51 = arith.constant 1.000000e+30 : f32
    %103 = arith.select %102, %cst_50, %cst_51 : f32
    %c1_i32_52 = arith.constant 1 : i32
    %104 = tpu.dynamic_rotate %92 by %c1_i32_52 dim 1 : vector<8x128xf32>, i32 -> vector<8x128xf32>
    %105 = vector.broadcast %103 : f32 to vector<8x128xf32>
    %106 = arith.select %5, %105, %104 : vector<8x128xi1>, vector<8x128xf32>
    %107 = arith.minimumf %92, %106 : vector<8x128xf32>
    %c1_i32_53 = arith.constant 1 : i32
    %108 = tpu.dynamic_rotate %99 by %c1_i32_53 dim 1 : vector<8x128xf32>, i32 -> vector<8x128xf32>
    %cst_54 = arith.constant 0.000000e+00 : f32
    %109 = vector.broadcast %cst_54 : f32 to vector<8x128xf32>
    %110 = arith.select %7, %109, %108 : vector<8x128xi1>, vector<8x128xf32>
    %111 = arith.addf %99, %110 : vector<8x128xf32>
    %c2_i32_55 = arith.constant 2 : i32
    %112 = tpu.dynamic_rotate %111 by %c2_i32_55 dim 1 : vector<8x128xf32>, i32 -> vector<8x128xf32>
    %cst_56 = arith.constant 0.000000e+00 : f32
    %113 = vector.broadcast %cst_56 : f32 to vector<8x128xf32>
    %114 = arith.select %9, %113, %112 : vector<8x128xi1>, vector<8x128xf32>
    %115 = arith.addf %111, %114 : vector<8x128xf32>
    %c4_i32_57 = arith.constant 4 : i32
    %116 = tpu.dynamic_rotate %115 by %c4_i32_57 dim 1 : vector<8x128xf32>, i32 -> vector<8x128xf32>
    %cst_58 = arith.constant 0.000000e+00 : f32
    %117 = vector.broadcast %cst_58 : f32 to vector<8x128xf32>
    %118 = arith.select %11, %117, %116 : vector<8x128xi1>, vector<8x128xf32>
    %119 = arith.addf %115, %118 : vector<8x128xf32>
    %c8_i32_59 = arith.constant 8 : i32
    %120 = tpu.dynamic_rotate %119 by %c8_i32_59 dim 1 : vector<8x128xf32>, i32 -> vector<8x128xf32>
    %cst_60 = arith.constant 0.000000e+00 : f32
    %121 = vector.broadcast %cst_60 : f32 to vector<8x128xf32>
    %122 = arith.select %13, %121, %120 : vector<8x128xi1>, vector<8x128xf32>
    %123 = arith.addf %119, %122 : vector<8x128xf32>
    %c16_i32_61 = arith.constant 16 : i32
    %124 = tpu.dynamic_rotate %123 by %c16_i32_61 dim 1 : vector<8x128xf32>, i32 -> vector<8x128xf32>
    %cst_62 = arith.constant 0.000000e+00 : f32
    %125 = vector.broadcast %cst_62 : f32 to vector<8x128xf32>
    %126 = arith.select %15, %125, %124 : vector<8x128xi1>, vector<8x128xf32>
    %127 = arith.addf %123, %126 : vector<8x128xf32>
    %c32_i32_63 = arith.constant 32 : i32
    %128 = tpu.dynamic_rotate %127 by %c32_i32_63 dim 1 : vector<8x128xf32>, i32 -> vector<8x128xf32>
    %cst_64 = arith.constant 0.000000e+00 : f32
    %129 = vector.broadcast %cst_64 : f32 to vector<8x128xf32>
    %130 = arith.select %17, %129, %128 : vector<8x128xi1>, vector<8x128xf32>
    %131 = arith.addf %127, %130 : vector<8x128xf32>
    %c64_i32_65 = arith.constant 64 : i32
    %132 = tpu.dynamic_rotate %131 by %c64_i32_65 dim 1 : vector<8x128xf32>, i32 -> vector<8x128xf32>
    %cst_66 = arith.constant 0.000000e+00 : f32
    %133 = vector.broadcast %cst_66 : f32 to vector<8x128xf32>
    %134 = arith.select %19, %133, %132 : vector<8x128xi1>, vector<8x128xf32>
    %135 = arith.addf %131, %134 : vector<8x128xf32>
    %c1_i32_67 = arith.constant 1 : i32
    %136 = tpu.dynamic_rotate %135 by %c1_i32_67 dim 1 : vector<8x128xf32>, i32 -> vector<8x128xf32>
    %cst_68 = arith.constant 0.000000e+00 : f32
    %137 = vector.broadcast %cst_68 : f32 to vector<8x128xf32>
    %138 = arith.select %5, %137, %136 : vector<8x128xi1>, vector<8x128xf32>
    %139 = arith.subf %107, %138 : vector<8x128xf32>
    %c1_i32_69 = arith.constant 1 : i32
    %140 = tpu.dynamic_rotate %139 by %c1_i32_69 dim 1 : vector<8x128xf32>, i32 -> vector<8x128xf32>
    %cst_70 = arith.constant 1.000000e+30 : f32
    %141 = vector.broadcast %cst_70 : f32 to vector<8x128xf32>
    %142 = arith.select %7, %141, %140 : vector<8x128xi1>, vector<8x128xf32>
    %143 = arith.minimumf %139, %142 : vector<8x128xf32>
    %c2_i32_71 = arith.constant 2 : i32
    %144 = tpu.dynamic_rotate %143 by %c2_i32_71 dim 1 : vector<8x128xf32>, i32 -> vector<8x128xf32>
    %cst_72 = arith.constant 1.000000e+30 : f32
    %145 = vector.broadcast %cst_72 : f32 to vector<8x128xf32>
    %146 = arith.select %9, %145, %144 : vector<8x128xi1>, vector<8x128xf32>
    %147 = arith.minimumf %143, %146 : vector<8x128xf32>
    %c4_i32_73 = arith.constant 4 : i32
    %148 = tpu.dynamic_rotate %147 by %c4_i32_73 dim 1 : vector<8x128xf32>, i32 -> vector<8x128xf32>
    %cst_74 = arith.constant 1.000000e+30 : f32
    %149 = vector.broadcast %cst_74 : f32 to vector<8x128xf32>
    %150 = arith.select %11, %149, %148 : vector<8x128xi1>, vector<8x128xf32>
    %151 = arith.minimumf %147, %150 : vector<8x128xf32>
    %c8_i32_75 = arith.constant 8 : i32
    %152 = tpu.dynamic_rotate %151 by %c8_i32_75 dim 1 : vector<8x128xf32>, i32 -> vector<8x128xf32>
    %cst_76 = arith.constant 1.000000e+30 : f32
    %153 = vector.broadcast %cst_76 : f32 to vector<8x128xf32>
    %154 = arith.select %13, %153, %152 : vector<8x128xi1>, vector<8x128xf32>
    %155 = arith.minimumf %151, %154 : vector<8x128xf32>
    %c16_i32_77 = arith.constant 16 : i32
    %156 = tpu.dynamic_rotate %155 by %c16_i32_77 dim 1 : vector<8x128xf32>, i32 -> vector<8x128xf32>
    %cst_78 = arith.constant 1.000000e+30 : f32
    %157 = vector.broadcast %cst_78 : f32 to vector<8x128xf32>
    %158 = arith.select %15, %157, %156 : vector<8x128xi1>, vector<8x128xf32>
    %159 = arith.minimumf %155, %158 : vector<8x128xf32>
    %c32_i32_79 = arith.constant 32 : i32
    %160 = tpu.dynamic_rotate %159 by %c32_i32_79 dim 1 : vector<8x128xf32>, i32 -> vector<8x128xf32>
    %cst_80 = arith.constant 1.000000e+30 : f32
    %161 = vector.broadcast %cst_80 : f32 to vector<8x128xf32>
    %162 = arith.select %17, %161, %160 : vector<8x128xi1>, vector<8x128xf32>
    %163 = arith.minimumf %159, %162 : vector<8x128xf32>
    %c64_i32_81 = arith.constant 64 : i32
    %164 = tpu.dynamic_rotate %163 by %c64_i32_81 dim 1 : vector<8x128xf32>, i32 -> vector<8x128xf32>
    %cst_82 = arith.constant 1.000000e+30 : f32
    %165 = vector.broadcast %cst_82 : f32 to vector<8x128xf32>
    %166 = arith.select %19, %165, %164 : vector<8x128xi1>, vector<8x128xf32>
    %167 = arith.minimumf %163, %166 : vector<8x128xf32>
    %168 = arith.addf %135, %167 : vector<8x128xf32>
    %c0_83 = arith.constant 0 : index
    %169 = arith.index_cast %c1_i32_44 : i32 to index
    %c0_84 = arith.constant 0 : index
    %c0_85 = arith.constant 0 : index
    %170 = vector.load %arg3[%c0_83, %169, %c0_84, %c0_85] : memref<1x8x8x128xf32, #tpu.memory_space<vmem>>, vector<1x1x8x128xf32>
    %171 = vector.shape_cast %170 : vector<1x1x8x128xf32> to vector<8x128xf32>
    %172 = vector.shape_cast %168 : vector<8x128xf32> to vector<1x1x8x128xf32>
    tpu.vector_store %arg3[%c0_83, %169, %c0_84, %c0_85], %172 {strides = array<i32>} : memref<1x8x8x128xf32, #tpu.memory_space<vmem>>, vector<1x1x8x128xf32>,
    %c2_i32_86 = arith.constant 2 : i32
    %c0_87 = arith.constant 0 : index
    %173 = arith.index_cast %c2_i32_86 : i32 to index
    %c0_88 = arith.constant 0 : index
    %c0_89 = arith.constant 0 : index
    %174 = vector.load %arg2[%c0_87, %173, %c0_88, %c0_89] : memref<1x8x8x128xf32, #tpu.memory_space<vmem>>, vector<1x1x8x128xf32>
    %175 = vector.shape_cast %174 : vector<1x1x8x128xf32> to vector<8x128xf32>
    %c0_i32_90 = arith.constant 0 : i32
    %176 = arith.cmpi eq, %arg1, %c0_i32_90 : i32
    %c0_i32_91 = arith.constant 0 : i32
    %177 = arith.cmpi eq, %c2_i32_86, %c0_i32_91 : i32
    %178 = arith.andi %176, %177 : i1
    %cst_92 = arith.constant 0.000000e+00 : f32
    %cst_93 = arith.constant 1.000000e+30 : f32
    %179 = arith.select %178, %cst_92, %cst_93 : f32
    %c1_i32_94 = arith.constant 1 : i32
    %180 = tpu.dynamic_rotate %168 by %c1_i32_94 dim 1 : vector<8x128xf32>, i32 -> vector<8x128xf32>
    %181 = vector.broadcast %179 : f32 to vector<8x128xf32>
    %182 = arith.select %5, %181, %180 : vector<8x128xi1>, vector<8x128xf32>
    %183 = arith.minimumf %168, %182 : vector<8x128xf32>
    %c1_i32_95 = arith.constant 1 : i32
    %184 = tpu.dynamic_rotate %175 by %c1_i32_95 dim 1 : vector<8x128xf32>, i32 -> vector<8x128xf32>
    %cst_96 = arith.constant 0.000000e+00 : f32
    %185 = vector.broadcast %cst_96 : f32 to vector<8x128xf32>
    %186 = arith.select %7, %185, %184 : vector<8x128xi1>, vector<8x128xf32>
    %187 = arith.addf %175, %186 : vector<8x128xf32>
    %c2_i32_97 = arith.constant 2 : i32
    %188 = tpu.dynamic_rotate %187 by %c2_i32_97 dim 1 : vector<8x128xf32>, i32 -> vector<8x128xf32>
    %cst_98 = arith.constant 0.000000e+00 : f32
    %189 = vector.broadcast %cst_98 : f32 to vector<8x128xf32>
    %190 = arith.select %9, %189, %188 : vector<8x128xi1>, vector<8x128xf32>
    %191 = arith.addf %187, %190 : vector<8x128xf32>
    %c4_i32_99 = arith.constant 4 : i32
    %192 = tpu.dynamic_rotate %191 by %c4_i32_99 dim 1 : vector<8x128xf32>, i32 -> vector<8x128xf32>
    %cst_100 = arith.constant 0.000000e+00 : f32
    %193 = vector.broadcast %cst_100 : f32 to vector<8x128xf32>
    %194 = arith.select %11, %193, %192 : vector<8x128xi1>, vector<8x128xf32>
    %195 = arith.addf %191, %194 : vector<8x128xf32>
    %c8_i32_101 = arith.constant 8 : i32
    %196 = tpu.dynamic_rotate %195 by %c8_i32_101 dim 1 : vector<8x128xf32>, i32 -> vector<8x128xf32>
    %cst_102 = arith.constant 0.000000e+00 : f32
    %197 = vector.broadcast %cst_102 : f32 to vector<8x128xf32>
    %198 = arith.select %13, %197, %196 : vector<8x128xi1>, vector<8x128xf32>
    %199 = arith.addf %195, %198 : vector<8x128xf32>
    %c16_i32_103 = arith.constant 16 : i32
    %200 = tpu.dynamic_rotate %199 by %c16_i32_103 dim 1 : vector<8x128xf32>, i32 -> vector<8x128xf32>
    %cst_104 = arith.constant 0.000000e+00 : f32
    %201 = vector.broadcast %cst_104 : f32 to vector<8x128xf32>
    %202 = arith.select %15, %201, %200 : vector<8x128xi1>, vector<8x128xf32>
    %203 = arith.addf %199, %202 : vector<8x128xf32>
    %c32_i32_105 = arith.constant 32 : i32
    %204 = tpu.dynamic_rotate %203 by %c32_i32_105 dim 1 : vector<8x128xf32>, i32 -> vector<8x128xf32>
    %cst_106 = arith.constant 0.000000e+00 : f32
    %205 = vector.broadcast %cst_106 : f32 to vector<8x128xf32>
    %206 = arith.select %17, %205, %204 : vector<8x128xi1>, vector<8x128xf32>
    %207 = arith.addf %203, %206 : vector<8x128xf32>
    %c64_i32_107 = arith.constant 64 : i32
    %208 = tpu.dynamic_rotate %207 by %c64_i32_107 dim 1 : vector<8x128xf32>, i32 -> vector<8x128xf32>
    %cst_108 = arith.constant 0.000000e+00 : f32
    %209 = vector.broadcast %cst_108 : f32 to vector<8x128xf32>
    %210 = arith.select %19, %209, %208 : vector<8x128xi1>, vector<8x128xf32>
    %211 = arith.addf %207, %210 : vector<8x128xf32>
    %c1_i32_109 = arith.constant 1 : i32
    %212 = tpu.dynamic_rotate %211 by %c1_i32_109 dim 1 : vector<8x128xf32>, i32 -> vector<8x128xf32>
    %cst_110 = arith.constant 0.000000e+00 : f32
    %213 = vector.broadcast %cst_110 : f32 to vector<8x128xf32>
    %214 = arith.select %5, %213, %212 : vector<8x128xi1>, vector<8x128xf32>
    %215 = arith.subf %183, %214 : vector<8x128xf32>
    %c1_i32_111 = arith.constant 1 : i32
    %216 = tpu.dynamic_rotate %215 by %c1_i32_111 dim 1 : vector<8x128xf32>, i32 -> vector<8x128xf32>
    %cst_112 = arith.constant 1.000000e+30 : f32
    %217 = vector.broadcast %cst_112 : f32 to vector<8x128xf32>
    %218 = arith.select %7, %217, %216 : vector<8x128xi1>, vector<8x128xf32>
    %219 = arith.minimumf %215, %218 : vector<8x128xf32>
    %c2_i32_113 = arith.constant 2 : i32
    %220 = tpu.dynamic_rotate %219 by %c2_i32_113 dim 1 : vector<8x128xf32>, i32 -> vector<8x128xf32>
    %cst_114 = arith.constant 1.000000e+30 : f32
    %221 = vector.broadcast %cst_114 : f32 to vector<8x128xf32>
    %222 = arith.select %9, %221, %220 : vector<8x128xi1>, vector<8x128xf32>
    %223 = arith.minimumf %219, %222 : vector<8x128xf32>
    %c4_i32_115 = arith.constant 4 : i32
    %224 = tpu.dynamic_rotate %223 by %c4_i32_115 dim 1 : vector<8x128xf32>, i32 -> vector<8x128xf32>
    %cst_116 = arith.constant 1.000000e+30 : f32
    %225 = vector.broadcast %cst_116 : f32 to vector<8x128xf32>
    %226 = arith.select %11, %225, %224 : vector<8x128xi1>, vector<8x128xf32>
    %227 = arith.minimumf %223, %226 : vector<8x128xf32>
    %c8_i32_117 = arith.constant 8 : i32
    %228 = tpu.dynamic_rotate %227 by %c8_i32_117 dim 1 : vector<8x128xf32>, i32 -> vector<8x128xf32>
    %cst_118 = arith.constant 1.000000e+30 : f32
    %229 = vector.broadcast %cst_118 : f32 to vector<8x128xf32>
    %230 = arith.select %13, %229, %228 : vector<8x128xi1>, vector<8x128xf32>
    %231 = arith.minimumf %227, %230 : vector<8x128xf32>
    %c16_i32_119 = arith.constant 16 : i32
    %232 = tpu.dynamic_rotate %231 by %c16_i32_119 dim 1 : vector<8x128xf32>, i32 -> vector<8x128xf32>
    %cst_120 = arith.constant 1.000000e+30 : f32
    %233 = vector.broadcast %cst_120 : f32 to vector<8x128xf32>
    %234 = arith.select %15, %233, %232 : vector<8x128xi1>, vector<8x128xf32>
    %235 = arith.minimumf %231, %234 : vector<8x128xf32>
    %c32_i32_121 = arith.constant 32 : i32
    %236 = tpu.dynamic_rotate %235 by %c32_i32_121 dim 1 : vector<8x128xf32>, i32 -> vector<8x128xf32>
    %cst_122 = arith.constant 1.000000e+30 : f32
    %237 = vector.broadcast %cst_122 : f32 to vector<8x128xf32>
    %238 = arith.select %17, %237, %236 : vector<8x128xi1>, vector<8x128xf32>
    %239 = arith.minimumf %235, %238 : vector<8x128xf32>
    %c64_i32_123 = arith.constant 64 : i32
    %240 = tpu.dynamic_rotate %239 by %c64_i32_123 dim 1 : vector<8x128xf32>, i32 -> vector<8x128xf32>
    %cst_124 = arith.constant 1.000000e+30 : f32
    %241 = vector.broadcast %cst_124 : f32 to vector<8x128xf32>
    %242 = arith.select %19, %241, %240 : vector<8x128xi1>, vector<8x128xf32>
    %243 = arith.minimumf %239, %242 : vector<8x128xf32>
    %244 = arith.addf %211, %243 : vector<8x128xf32>
    %c0_125 = arith.constant 0 : index
    %245 = arith.index_cast %c2_i32_86 : i32 to index
    %c0_126 = arith.constant 0 : index
    %c0_127 = arith.constant 0 : index
    %246 = vector.load %arg3[%c0_125, %245, %c0_126, %c0_127] : memref<1x8x8x128xf32, #tpu.memory_space<vmem>>, vector<1x1x8x128xf32>
    %247 = vector.shape_cast %246 : vector<1x1x8x128xf32> to vector<8x128xf32>
    %248 = vector.shape_cast %244 : vector<8x128xf32> to vector<1x1x8x128xf32>
    tpu.vector_store %arg3[%c0_125, %245, %c0_126, %c0_127], %248 {strides = array<i32>} : memref<1x8x8x128xf32, #tpu.memory_space<vmem>>, vector<1x1x8x128xf32>,
    %c3_i32 = arith.constant 3 : i32
    %c0_128 = arith.constant 0 : index
    %249 = arith.index_cast %c3_i32 : i32 to index
    %c0_129 = arith.constant 0 : index
    %c0_130 = arith.constant 0 : index
    %250 = vector.load %arg2[%c0_128, %249, %c0_129, %c0_130] : memref<1x8x8x128xf32, #tpu.memory_space<vmem>>, vector<1x1x8x128xf32>
    %251 = vector.shape_cast %250 : vector<1x1x8x128xf32> to vector<8x128xf32>
    %c0_i32_131 = arith.constant 0 : i32
    %252 = arith.cmpi eq, %arg1, %c0_i32_131 : i32
    %c0_i32_132 = arith.constant 0 : i32
    %253 = arith.cmpi eq, %c3_i32, %c0_i32_132 : i32
    %254 = arith.andi %252, %253 : i1
    %cst_133 = arith.constant 0.000000e+00 : f32
    %cst_134 = arith.constant 1.000000e+30 : f32
    %255 = arith.select %254, %cst_133, %cst_134 : f32
    %c1_i32_135 = arith.constant 1 : i32
    %256 = tpu.dynamic_rotate %244 by %c1_i32_135 dim 1 : vector<8x128xf32>, i32 -> vector<8x128xf32>
    %257 = vector.broadcast %255 : f32 to vector<8x128xf32>
    %258 = arith.select %5, %257, %256 : vector<8x128xi1>, vector<8x128xf32>
    %259 = arith.minimumf %244, %258 : vector<8x128xf32>
    %c1_i32_136 = arith.constant 1 : i32
    %260 = tpu.dynamic_rotate %251 by %c1_i32_136 dim 1 : vector<8x128xf32>, i32 -> vector<8x128xf32>
    %cst_137 = arith.constant 0.000000e+00 : f32
    %261 = vector.broadcast %cst_137 : f32 to vector<8x128xf32>
    %262 = arith.select %7, %261, %260 : vector<8x128xi1>, vector<8x128xf32>
    %263 = arith.addf %251, %262 : vector<8x128xf32>
    %c2_i32_138 = arith.constant 2 : i32
    %264 = tpu.dynamic_rotate %263 by %c2_i32_138 dim 1 : vector<8x128xf32>, i32 -> vector<8x128xf32>
    %cst_139 = arith.constant 0.000000e+00 : f32
    %265 = vector.broadcast %cst_139 : f32 to vector<8x128xf32>
    %266 = arith.select %9, %265, %264 : vector<8x128xi1>, vector<8x128xf32>
    %267 = arith.addf %263, %266 : vector<8x128xf32>
    %c4_i32_140 = arith.constant 4 : i32
    %268 = tpu.dynamic_rotate %267 by %c4_i32_140 dim 1 : vector<8x128xf32>, i32 -> vector<8x128xf32>
    %cst_141 = arith.constant 0.000000e+00 : f32
    %269 = vector.broadcast %cst_141 : f32 to vector<8x128xf32>
    %270 = arith.select %11, %269, %268 : vector<8x128xi1>, vector<8x128xf32>
    %271 = arith.addf %267, %270 : vector<8x128xf32>
    %c8_i32_142 = arith.constant 8 : i32
    %272 = tpu.dynamic_rotate %271 by %c8_i32_142 dim 1 : vector<8x128xf32>, i32 -> vector<8x128xf32>
    %cst_143 = arith.constant 0.000000e+00 : f32
    %273 = vector.broadcast %cst_143 : f32 to vector<8x128xf32>
    %274 = arith.select %13, %273, %272 : vector<8x128xi1>, vector<8x128xf32>
    %275 = arith.addf %271, %274 : vector<8x128xf32>
    %c16_i32_144 = arith.constant 16 : i32
    %276 = tpu.dynamic_rotate %275 by %c16_i32_144 dim 1 : vector<8x128xf32>, i32 -> vector<8x128xf32>
    %cst_145 = arith.constant 0.000000e+00 : f32
    %277 = vector.broadcast %cst_145 : f32 to vector<8x128xf32>
    %278 = arith.select %15, %277, %276 : vector<8x128xi1>, vector<8x128xf32>
    %279 = arith.addf %275, %278 : vector<8x128xf32>
    %c32_i32_146 = arith.constant 32 : i32
    %280 = tpu.dynamic_rotate %279 by %c32_i32_146 dim 1 : vector<8x128xf32>, i32 -> vector<8x128xf32>
    %cst_147 = arith.constant 0.000000e+00 : f32
    %281 = vector.broadcast %cst_147 : f32 to vector<8x128xf32>
    %282 = arith.select %17, %281, %280 : vector<8x128xi1>, vector<8x128xf32>
    %283 = arith.addf %279, %282 : vector<8x128xf32>
    %c64_i32_148 = arith.constant 64 : i32
    %284 = tpu.dynamic_rotate %283 by %c64_i32_148 dim 1 : vector<8x128xf32>, i32 -> vector<8x128xf32>
    %cst_149 = arith.constant 0.000000e+00 : f32
    %285 = vector.broadcast %cst_149 : f32 to vector<8x128xf32>
    %286 = arith.select %19, %285, %284 : vector<8x128xi1>, vector<8x128xf32>
    %287 = arith.addf %283, %286 : vector<8x128xf32>
    %c1_i32_150 = arith.constant 1 : i32
    %288 = tpu.dynamic_rotate %287 by %c1_i32_150 dim 1 : vector<8x128xf32>, i32 -> vector<8x128xf32>
    %cst_151 = arith.constant 0.000000e+00 : f32
    %289 = vector.broadcast %cst_151 : f32 to vector<8x128xf32>
    %290 = arith.select %5, %289, %288 : vector<8x128xi1>, vector<8x128xf32>
    %291 = arith.subf %259, %290 : vector<8x128xf32>
    %c1_i32_152 = arith.constant 1 : i32
    %292 = tpu.dynamic_rotate %291 by %c1_i32_152 dim 1 : vector<8x128xf32>, i32 -> vector<8x128xf32>
    %cst_153 = arith.constant 1.000000e+30 : f32
    %293 = vector.broadcast %cst_153 : f32 to vector<8x128xf32>
    %294 = arith.select %7, %293, %292 : vector<8x128xi1>, vector<8x128xf32>
    %295 = arith.minimumf %291, %294 : vector<8x128xf32>
    %c2_i32_154 = arith.constant 2 : i32
    %296 = tpu.dynamic_rotate %295 by %c2_i32_154 dim 1 : vector<8x128xf32>, i32 -> vector<8x128xf32>
    %cst_155 = arith.constant 1.000000e+30 : f32
    %297 = vector.broadcast %cst_155 : f32 to vector<8x128xf32>
    %298 = arith.select %9, %297, %296 : vector<8x128xi1>, vector<8x128xf32>
    %299 = arith.minimumf %295, %298 : vector<8x128xf32>
    %c4_i32_156 = arith.constant 4 : i32
    %300 = tpu.dynamic_rotate %299 by %c4_i32_156 dim 1 : vector<8x128xf32>, i32 -> vector<8x128xf32>
    %cst_157 = arith.constant 1.000000e+30 : f32
    %301 = vector.broadcast %cst_157 : f32 to vector<8x128xf32>
    %302 = arith.select %11, %301, %300 : vector<8x128xi1>, vector<8x128xf32>
    %303 = arith.minimumf %299, %302 : vector<8x128xf32>
    %c8_i32_158 = arith.constant 8 : i32
    %304 = tpu.dynamic_rotate %303 by %c8_i32_158 dim 1 : vector<8x128xf32>, i32 -> vector<8x128xf32>
    %cst_159 = arith.constant 1.000000e+30 : f32
    %305 = vector.broadcast %cst_159 : f32 to vector<8x128xf32>
    %306 = arith.select %13, %305, %304 : vector<8x128xi1>, vector<8x128xf32>
    %307 = arith.minimumf %303, %306 : vector<8x128xf32>
    %c16_i32_160 = arith.constant 16 : i32
    %308 = tpu.dynamic_rotate %307 by %c16_i32_160 dim 1 : vector<8x128xf32>, i32 -> vector<8x128xf32>
    %cst_161 = arith.constant 1.000000e+30 : f32
    %309 = vector.broadcast %cst_161 : f32 to vector<8x128xf32>
    %310 = arith.select %15, %309, %308 : vector<8x128xi1>, vector<8x128xf32>
    %311 = arith.minimumf %307, %310 : vector<8x128xf32>
    %c32_i32_162 = arith.constant 32 : i32
    %312 = tpu.dynamic_rotate %311 by %c32_i32_162 dim 1 : vector<8x128xf32>, i32 -> vector<8x128xf32>
    %cst_163 = arith.constant 1.000000e+30 : f32
    %313 = vector.broadcast %cst_163 : f32 to vector<8x128xf32>
    %314 = arith.select %17, %313, %312 : vector<8x128xi1>, vector<8x128xf32>
    %315 = arith.minimumf %311, %314 : vector<8x128xf32>
    %c64_i32_164 = arith.constant 64 : i32
    %316 = tpu.dynamic_rotate %315 by %c64_i32_164 dim 1 : vector<8x128xf32>, i32 -> vector<8x128xf32>
    %cst_165 = arith.constant 1.000000e+30 : f32
    %317 = vector.broadcast %cst_165 : f32 to vector<8x128xf32>
    %318 = arith.select %19, %317, %316 : vector<8x128xi1>, vector<8x128xf32>
    %319 = arith.minimumf %315, %318 : vector<8x128xf32>
    %320 = arith.addf %287, %319 : vector<8x128xf32>
    %c0_166 = arith.constant 0 : index
    %321 = arith.index_cast %c3_i32 : i32 to index
    %c0_167 = arith.constant 0 : index
    %c0_168 = arith.constant 0 : index
    %322 = vector.load %arg3[%c0_166, %321, %c0_167, %c0_168] : memref<1x8x8x128xf32, #tpu.memory_space<vmem>>, vector<1x1x8x128xf32>
    %323 = vector.shape_cast %322 : vector<1x1x8x128xf32> to vector<8x128xf32>
    %324 = vector.shape_cast %320 : vector<8x128xf32> to vector<1x1x8x128xf32>
    tpu.vector_store %arg3[%c0_166, %321, %c0_167, %c0_168], %324 {strides = array<i32>} : memref<1x8x8x128xf32, #tpu.memory_space<vmem>>, vector<1x1x8x128xf32>,
    %c4_i32_169 = arith.constant 4 : i32
    %c0_170 = arith.constant 0 : index
    %325 = arith.index_cast %c4_i32_169 : i32 to index
    %c0_171 = arith.constant 0 : index
    %c0_172 = arith.constant 0 : index
    %326 = vector.load %arg2[%c0_170, %325, %c0_171, %c0_172] : memref<1x8x8x128xf32, #tpu.memory_space<vmem>>, vector<1x1x8x128xf32>
    %327 = vector.shape_cast %326 : vector<1x1x8x128xf32> to vector<8x128xf32>
    %c0_i32_173 = arith.constant 0 : i32
    %328 = arith.cmpi eq, %arg1, %c0_i32_173 : i32
    %c0_i32_174 = arith.constant 0 : i32
    %329 = arith.cmpi eq, %c4_i32_169, %c0_i32_174 : i32
    %330 = arith.andi %328, %329 : i1
    %cst_175 = arith.constant 0.000000e+00 : f32
    %cst_176 = arith.constant 1.000000e+30 : f32
    %331 = arith.select %330, %cst_175, %cst_176 : f32
    %c1_i32_177 = arith.constant 1 : i32
    %332 = tpu.dynamic_rotate %320 by %c1_i32_177 dim 1 : vector<8x128xf32>, i32 -> vector<8x128xf32>
    %333 = vector.broadcast %331 : f32 to vector<8x128xf32>
    %334 = arith.select %5, %333, %332 : vector<8x128xi1>, vector<8x128xf32>
    %335 = arith.minimumf %320, %334 : vector<8x128xf32>
    %c1_i32_178 = arith.constant 1 : i32
    %336 = tpu.dynamic_rotate %327 by %c1_i32_178 dim 1 : vector<8x128xf32>, i32 -> vector<8x128xf32>
    %cst_179 = arith.constant 0.000000e+00 : f32
    %337 = vector.broadcast %cst_179 : f32 to vector<8x128xf32>
    %338 = arith.select %7, %337, %336 : vector<8x128xi1>, vector<8x128xf32>
    %339 = arith.addf %327, %338 : vector<8x128xf32>
    %c2_i32_180 = arith.constant 2 : i32
    %340 = tpu.dynamic_rotate %339 by %c2_i32_180 dim 1 : vector<8x128xf32>, i32 -> vector<8x128xf32>
    %cst_181 = arith.constant 0.000000e+00 : f32
    %341 = vector.broadcast %cst_181 : f32 to vector<8x128xf32>
    %342 = arith.select %9, %341, %340 : vector<8x128xi1>, vector<8x128xf32>
    %343 = arith.addf %339, %342 : vector<8x128xf32>
    %c4_i32_182 = arith.constant 4 : i32
    %344 = tpu.dynamic_rotate %343 by %c4_i32_182 dim 1 : vector<8x128xf32>, i32 -> vector<8x128xf32>
    %cst_183 = arith.constant 0.000000e+00 : f32
    %345 = vector.broadcast %cst_183 : f32 to vector<8x128xf32>
    %346 = arith.select %11, %345, %344 : vector<8x128xi1>, vector<8x128xf32>
    %347 = arith.addf %343, %346 : vector<8x128xf32>
    %c8_i32_184 = arith.constant 8 : i32
    %348 = tpu.dynamic_rotate %347 by %c8_i32_184 dim 1 : vector<8x128xf32>, i32 -> vector<8x128xf32>
    %cst_185 = arith.constant 0.000000e+00 : f32
    %349 = vector.broadcast %cst_185 : f32 to vector<8x128xf32>
    %350 = arith.select %13, %349, %348 : vector<8x128xi1>, vector<8x128xf32>
    %351 = arith.addf %347, %350 : vector<8x128xf32>
    %c16_i32_186 = arith.constant 16 : i32
    %352 = tpu.dynamic_rotate %351 by %c16_i32_186 dim 1 : vector<8x128xf32>, i32 -> vector<8x128xf32>
    %cst_187 = arith.constant 0.000000e+00 : f32
    %353 = vector.broadcast %cst_187 : f32 to vector<8x128xf32>
    %354 = arith.select %15, %353, %352 : vector<8x128xi1>, vector<8x128xf32>
    %355 = arith.addf %351, %354 : vector<8x128xf32>
    %c32_i32_188 = arith.constant 32 : i32
    %356 = tpu.dynamic_rotate %355 by %c32_i32_188 dim 1 : vector<8x128xf32>, i32 -> vector<8x128xf32>
    %cst_189 = arith.constant 0.000000e+00 : f32
    %357 = vector.broadcast %cst_189 : f32 to vector<8x128xf32>
    %358 = arith.select %17, %357, %356 : vector<8x128xi1>, vector<8x128xf32>
    %359 = arith.addf %355, %358 : vector<8x128xf32>
    %c64_i32_190 = arith.constant 64 : i32
    %360 = tpu.dynamic_rotate %359 by %c64_i32_190 dim 1 : vector<8x128xf32>, i32 -> vector<8x128xf32>
    %cst_191 = arith.constant 0.000000e+00 : f32
    %361 = vector.broadcast %cst_191 : f32 to vector<8x128xf32>
    %362 = arith.select %19, %361, %360 : vector<8x128xi1>, vector<8x128xf32>
    %363 = arith.addf %359, %362 : vector<8x128xf32>
    %c1_i32_192 = arith.constant 1 : i32
    %364 = tpu.dynamic_rotate %363 by %c1_i32_192 dim 1 : vector<8x128xf32>, i32 -> vector<8x128xf32>
    %cst_193 = arith.constant 0.000000e+00 : f32
    %365 = vector.broadcast %cst_193 : f32 to vector<8x128xf32>
    %366 = arith.select %5, %365, %364 : vector<8x128xi1>, vector<8x128xf32>
    %367 = arith.subf %335, %366 : vector<8x128xf32>
    %c1_i32_194 = arith.constant 1 : i32
    %368 = tpu.dynamic_rotate %367 by %c1_i32_194 dim 1 : vector<8x128xf32>, i32 -> vector<8x128xf32>
    %cst_195 = arith.constant 1.000000e+30 : f32
    %369 = vector.broadcast %cst_195 : f32 to vector<8x128xf32>
    %370 = arith.select %7, %369, %368 : vector<8x128xi1>, vector<8x128xf32>
    %371 = arith.minimumf %367, %370 : vector<8x128xf32>
    %c2_i32_196 = arith.constant 2 : i32
    %372 = tpu.dynamic_rotate %371 by %c2_i32_196 dim 1 : vector<8x128xf32>, i32 -> vector<8x128xf32>
    %cst_197 = arith.constant 1.000000e+30 : f32
    %373 = vector.broadcast %cst_197 : f32 to vector<8x128xf32>
    %374 = arith.select %9, %373, %372 : vector<8x128xi1>, vector<8x128xf32>
    %375 = arith.minimumf %371, %374 : vector<8x128xf32>
    %c4_i32_198 = arith.constant 4 : i32
    %376 = tpu.dynamic_rotate %375 by %c4_i32_198 dim 1 : vector<8x128xf32>, i32 -> vector<8x128xf32>
    %cst_199 = arith.constant 1.000000e+30 : f32
    %377 = vector.broadcast %cst_199 : f32 to vector<8x128xf32>
    %378 = arith.select %11, %377, %376 : vector<8x128xi1>, vector<8x128xf32>
    %379 = arith.minimumf %375, %378 : vector<8x128xf32>
    %c8_i32_200 = arith.constant 8 : i32
    %380 = tpu.dynamic_rotate %379 by %c8_i32_200 dim 1 : vector<8x128xf32>, i32 -> vector<8x128xf32>
    %cst_201 = arith.constant 1.000000e+30 : f32
    %381 = vector.broadcast %cst_201 : f32 to vector<8x128xf32>
    %382 = arith.select %13, %381, %380 : vector<8x128xi1>, vector<8x128xf32>
    %383 = arith.minimumf %379, %382 : vector<8x128xf32>
    %c16_i32_202 = arith.constant 16 : i32
    %384 = tpu.dynamic_rotate %383 by %c16_i32_202 dim 1 : vector<8x128xf32>, i32 -> vector<8x128xf32>
    %cst_203 = arith.constant 1.000000e+30 : f32
    %385 = vector.broadcast %cst_203 : f32 to vector<8x128xf32>
    %386 = arith.select %15, %385, %384 : vector<8x128xi1>, vector<8x128xf32>
    %387 = arith.minimumf %383, %386 : vector<8x128xf32>
    %c32_i32_204 = arith.constant 32 : i32
    %388 = tpu.dynamic_rotate %387 by %c32_i32_204 dim 1 : vector<8x128xf32>, i32 -> vector<8x128xf32>
    %cst_205 = arith.constant 1.000000e+30 : f32
    %389 = vector.broadcast %cst_205 : f32 to vector<8x128xf32>
    %390 = arith.select %17, %389, %388 : vector<8x128xi1>, vector<8x128xf32>
    %391 = arith.minimumf %387, %390 : vector<8x128xf32>
    %c64_i32_206 = arith.constant 64 : i32
    %392 = tpu.dynamic_rotate %391 by %c64_i32_206 dim 1 : vector<8x128xf32>, i32 -> vector<8x128xf32>
    %cst_207 = arith.constant 1.000000e+30 : f32
    %393 = vector.broadcast %cst_207 : f32 to vector<8x128xf32>
    %394 = arith.select %19, %393, %392 : vector<8x128xi1>, vector<8x128xf32>
    %395 = arith.minimumf %391, %394 : vector<8x128xf32>
    %396 = arith.addf %363, %395 : vector<8x128xf32>
    %c0_208 = arith.constant 0 : index
    %397 = arith.index_cast %c4_i32_169 : i32 to index
    %c0_209 = arith.constant 0 : index
    %c0_210 = arith.constant 0 : index
    %398 = vector.load %arg3[%c0_208, %397, %c0_209, %c0_210] : memref<1x8x8x128xf32, #tpu.memory_space<vmem>>, vector<1x1x8x128xf32>
    %399 = vector.shape_cast %398 : vector<1x1x8x128xf32> to vector<8x128xf32>
    %400 = vector.shape_cast %396 : vector<8x128xf32> to vector<1x1x8x128xf32>
    tpu.vector_store %arg3[%c0_208, %397, %c0_209, %c0_210], %400 {strides = array<i32>} : memref<1x8x8x128xf32, #tpu.memory_space<vmem>>, vector<1x1x8x128xf32>,
    %c5_i32 = arith.constant 5 : i32
    %c0_211 = arith.constant 0 : index
    %401 = arith.index_cast %c5_i32 : i32 to index
    %c0_212 = arith.constant 0 : index
    %c0_213 = arith.constant 0 : index
    %402 = vector.load %arg2[%c0_211, %401, %c0_212, %c0_213] : memref<1x8x8x128xf32, #tpu.memory_space<vmem>>, vector<1x1x8x128xf32>
    %403 = vector.shape_cast %402 : vector<1x1x8x128xf32> to vector<8x128xf32>
    %c0_i32_214 = arith.constant 0 : i32
    %404 = arith.cmpi eq, %arg1, %c0_i32_214 : i32
    %c0_i32_215 = arith.constant 0 : i32
    %405 = arith.cmpi eq, %c5_i32, %c0_i32_215 : i32
    %406 = arith.andi %404, %405 : i1
    %cst_216 = arith.constant 0.000000e+00 : f32
    %cst_217 = arith.constant 1.000000e+30 : f32
    %407 = arith.select %406, %cst_216, %cst_217 : f32
    %c1_i32_218 = arith.constant 1 : i32
    %408 = tpu.dynamic_rotate %396 by %c1_i32_218 dim 1 : vector<8x128xf32>, i32 -> vector<8x128xf32>
    %409 = vector.broadcast %407 : f32 to vector<8x128xf32>
    %410 = arith.select %5, %409, %408 : vector<8x128xi1>, vector<8x128xf32>
    %411 = arith.minimumf %396, %410 : vector<8x128xf32>
    %c1_i32_219 = arith.constant 1 : i32
    %412 = tpu.dynamic_rotate %403 by %c1_i32_219 dim 1 : vector<8x128xf32>, i32 -> vector<8x128xf32>
    %cst_220 = arith.constant 0.000000e+00 : f32
    %413 = vector.broadcast %cst_220 : f32 to vector<8x128xf32>
    %414 = arith.select %7, %413, %412 : vector<8x128xi1>, vector<8x128xf32>
    %415 = arith.addf %403, %414 : vector<8x128xf32>
    %c2_i32_221 = arith.constant 2 : i32
    %416 = tpu.dynamic_rotate %415 by %c2_i32_221 dim 1 : vector<8x128xf32>, i32 -> vector<8x128xf32>
    %cst_222 = arith.constant 0.000000e+00 : f32
    %417 = vector.broadcast %cst_222 : f32 to vector<8x128xf32>
    %418 = arith.select %9, %417, %416 : vector<8x128xi1>, vector<8x128xf32>
    %419 = arith.addf %415, %418 : vector<8x128xf32>
    %c4_i32_223 = arith.constant 4 : i32
    %420 = tpu.dynamic_rotate %419 by %c4_i32_223 dim 1 : vector<8x128xf32>, i32 -> vector<8x128xf32>
    %cst_224 = arith.constant 0.000000e+00 : f32
    %421 = vector.broadcast %cst_224 : f32 to vector<8x128xf32>
    %422 = arith.select %11, %421, %420 : vector<8x128xi1>, vector<8x128xf32>
    %423 = arith.addf %419, %422 : vector<8x128xf32>
    %c8_i32_225 = arith.constant 8 : i32
    %424 = tpu.dynamic_rotate %423 by %c8_i32_225 dim 1 : vector<8x128xf32>, i32 -> vector<8x128xf32>
    %cst_226 = arith.constant 0.000000e+00 : f32
    %425 = vector.broadcast %cst_226 : f32 to vector<8x128xf32>
    %426 = arith.select %13, %425, %424 : vector<8x128xi1>, vector<8x128xf32>
    %427 = arith.addf %423, %426 : vector<8x128xf32>
    %c16_i32_227 = arith.constant 16 : i32
    %428 = tpu.dynamic_rotate %427 by %c16_i32_227 dim 1 : vector<8x128xf32>, i32 -> vector<8x128xf32>
    %cst_228 = arith.constant 0.000000e+00 : f32
    %429 = vector.broadcast %cst_228 : f32 to vector<8x128xf32>
    %430 = arith.select %15, %429, %428 : vector<8x128xi1>, vector<8x128xf32>
    %431 = arith.addf %427, %430 : vector<8x128xf32>
    %c32_i32_229 = arith.constant 32 : i32
    %432 = tpu.dynamic_rotate %431 by %c32_i32_229 dim 1 : vector<8x128xf32>, i32 -> vector<8x128xf32>
    %cst_230 = arith.constant 0.000000e+00 : f32
    %433 = vector.broadcast %cst_230 : f32 to vector<8x128xf32>
    %434 = arith.select %17, %433, %432 : vector<8x128xi1>, vector<8x128xf32>
    %435 = arith.addf %431, %434 : vector<8x128xf32>
    %c64_i32_231 = arith.constant 64 : i32
    %436 = tpu.dynamic_rotate %435 by %c64_i32_231 dim 1 : vector<8x128xf32>, i32 -> vector<8x128xf32>
    %cst_232 = arith.constant 0.000000e+00 : f32
    %437 = vector.broadcast %cst_232 : f32 to vector<8x128xf32>
    %438 = arith.select %19, %437, %436 : vector<8x128xi1>, vector<8x128xf32>
    %439 = arith.addf %435, %438 : vector<8x128xf32>
    %c1_i32_233 = arith.constant 1 : i32
    %440 = tpu.dynamic_rotate %439 by %c1_i32_233 dim 1 : vector<8x128xf32>, i32 -> vector<8x128xf32>
    %cst_234 = arith.constant 0.000000e+00 : f32
    %441 = vector.broadcast %cst_234 : f32 to vector<8x128xf32>
    %442 = arith.select %5, %441, %440 : vector<8x128xi1>, vector<8x128xf32>
    %443 = arith.subf %411, %442 : vector<8x128xf32>
    %c1_i32_235 = arith.constant 1 : i32
    %444 = tpu.dynamic_rotate %443 by %c1_i32_235 dim 1 : vector<8x128xf32>, i32 -> vector<8x128xf32>
    %cst_236 = arith.constant 1.000000e+30 : f32
    %445 = vector.broadcast %cst_236 : f32 to vector<8x128xf32>
    %446 = arith.select %7, %445, %444 : vector<8x128xi1>, vector<8x128xf32>
    %447 = arith.minimumf %443, %446 : vector<8x128xf32>
    %c2_i32_237 = arith.constant 2 : i32
    %448 = tpu.dynamic_rotate %447 by %c2_i32_237 dim 1 : vector<8x128xf32>, i32 -> vector<8x128xf32>
    %cst_238 = arith.constant 1.000000e+30 : f32
    %449 = vector.broadcast %cst_238 : f32 to vector<8x128xf32>
    %450 = arith.select %9, %449, %448 : vector<8x128xi1>, vector<8x128xf32>
    %451 = arith.minimumf %447, %450 : vector<8x128xf32>
    %c4_i32_239 = arith.constant 4 : i32
    %452 = tpu.dynamic_rotate %451 by %c4_i32_239 dim 1 : vector<8x128xf32>, i32 -> vector<8x128xf32>
    %cst_240 = arith.constant 1.000000e+30 : f32
    %453 = vector.broadcast %cst_240 : f32 to vector<8x128xf32>
    %454 = arith.select %11, %453, %452 : vector<8x128xi1>, vector<8x128xf32>
    %455 = arith.minimumf %451, %454 : vector<8x128xf32>
    %c8_i32_241 = arith.constant 8 : i32
    %456 = tpu.dynamic_rotate %455 by %c8_i32_241 dim 1 : vector<8x128xf32>, i32 -> vector<8x128xf32>
    %cst_242 = arith.constant 1.000000e+30 : f32
    %457 = vector.broadcast %cst_242 : f32 to vector<8x128xf32>
    %458 = arith.select %13, %457, %456 : vector<8x128xi1>, vector<8x128xf32>
    %459 = arith.minimumf %455, %458 : vector<8x128xf32>
    %c16_i32_243 = arith.constant 16 : i32
    %460 = tpu.dynamic_rotate %459 by %c16_i32_243 dim 1 : vector<8x128xf32>, i32 -> vector<8x128xf32>
    %cst_244 = arith.constant 1.000000e+30 : f32
    %461 = vector.broadcast %cst_244 : f32 to vector<8x128xf32>
    %462 = arith.select %15, %461, %460 : vector<8x128xi1>, vector<8x128xf32>
    %463 = arith.minimumf %459, %462 : vector<8x128xf32>
    %c32_i32_245 = arith.constant 32 : i32
    %464 = tpu.dynamic_rotate %463 by %c32_i32_245 dim 1 : vector<8x128xf32>, i32 -> vector<8x128xf32>
    %cst_246 = arith.constant 1.000000e+30 : f32
    %465 = vector.broadcast %cst_246 : f32 to vector<8x128xf32>
    %466 = arith.select %17, %465, %464 : vector<8x128xi1>, vector<8x128xf32>
    %467 = arith.minimumf %463, %466 : vector<8x128xf32>
    %c64_i32_247 = arith.constant 64 : i32
    %468 = tpu.dynamic_rotate %467 by %c64_i32_247 dim 1 : vector<8x128xf32>, i32 -> vector<8x128xf32>
    %cst_248 = arith.constant 1.000000e+30 : f32
    %469 = vector.broadcast %cst_248 : f32 to vector<8x128xf32>
    %470 = arith.select %19, %469, %468 : vector<8x128xi1>, vector<8x128xf32>
    %471 = arith.minimumf %467, %470 : vector<8x128xf32>
    %472 = arith.addf %439, %471 : vector<8x128xf32>
    %c0_249 = arith.constant 0 : index
    %473 = arith.index_cast %c5_i32 : i32 to index
    %c0_250 = arith.constant 0 : index
    %c0_251 = arith.constant 0 : index
    %474 = vector.load %arg3[%c0_249, %473, %c0_250, %c0_251] : memref<1x8x8x128xf32, #tpu.memory_space<vmem>>, vector<1x1x8x128xf32>
    %475 = vector.shape_cast %474 : vector<1x1x8x128xf32> to vector<8x128xf32>
    %476 = vector.shape_cast %472 : vector<8x128xf32> to vector<1x1x8x128xf32>
    tpu.vector_store %arg3[%c0_249, %473, %c0_250, %c0_251], %476 {strides = array<i32>} : memref<1x8x8x128xf32, #tpu.memory_space<vmem>>, vector<1x1x8x128xf32>,
    %c6_i32 = arith.constant 6 : i32
    %c0_252 = arith.constant 0 : index
    %477 = arith.index_cast %c6_i32 : i32 to index
    %c0_253 = arith.constant 0 : index
    %c0_254 = arith.constant 0 : index
    %478 = vector.load %arg2[%c0_252, %477, %c0_253, %c0_254] : memref<1x8x8x128xf32, #tpu.memory_space<vmem>>, vector<1x1x8x128xf32>
    %479 = vector.shape_cast %478 : vector<1x1x8x128xf32> to vector<8x128xf32>
    %c0_i32_255 = arith.constant 0 : i32
    %480 = arith.cmpi eq, %arg1, %c0_i32_255 : i32
    %c0_i32_256 = arith.constant 0 : i32
    %481 = arith.cmpi eq, %c6_i32, %c0_i32_256 : i32
    %482 = arith.andi %480, %481 : i1
    %cst_257 = arith.constant 0.000000e+00 : f32
    %cst_258 = arith.constant 1.000000e+30 : f32
    %483 = arith.select %482, %cst_257, %cst_258 : f32
    %c1_i32_259 = arith.constant 1 : i32
    %484 = tpu.dynamic_rotate %472 by %c1_i32_259 dim 1 : vector<8x128xf32>, i32 -> vector<8x128xf32>
    %485 = vector.broadcast %483 : f32 to vector<8x128xf32>
    %486 = arith.select %5, %485, %484 : vector<8x128xi1>, vector<8x128xf32>
    %487 = arith.minimumf %472, %486 : vector<8x128xf32>
    %c1_i32_260 = arith.constant 1 : i32
    %488 = tpu.dynamic_rotate %479 by %c1_i32_260 dim 1 : vector<8x128xf32>, i32 -> vector<8x128xf32>
    %cst_261 = arith.constant 0.000000e+00 : f32
    %489 = vector.broadcast %cst_261 : f32 to vector<8x128xf32>
    %490 = arith.select %7, %489, %488 : vector<8x128xi1>, vector<8x128xf32>
    %491 = arith.addf %479, %490 : vector<8x128xf32>
    %c2_i32_262 = arith.constant 2 : i32
    %492 = tpu.dynamic_rotate %491 by %c2_i32_262 dim 1 : vector<8x128xf32>, i32 -> vector<8x128xf32>
    %cst_263 = arith.constant 0.000000e+00 : f32
    %493 = vector.broadcast %cst_263 : f32 to vector<8x128xf32>
    %494 = arith.select %9, %493, %492 : vector<8x128xi1>, vector<8x128xf32>
    %495 = arith.addf %491, %494 : vector<8x128xf32>
    %c4_i32_264 = arith.constant 4 : i32
    %496 = tpu.dynamic_rotate %495 by %c4_i32_264 dim 1 : vector<8x128xf32>, i32 -> vector<8x128xf32>
    %cst_265 = arith.constant 0.000000e+00 : f32
    %497 = vector.broadcast %cst_265 : f32 to vector<8x128xf32>
    %498 = arith.select %11, %497, %496 : vector<8x128xi1>, vector<8x128xf32>
    %499 = arith.addf %495, %498 : vector<8x128xf32>
    %c8_i32_266 = arith.constant 8 : i32
    %500 = tpu.dynamic_rotate %499 by %c8_i32_266 dim 1 : vector<8x128xf32>, i32 -> vector<8x128xf32>
    %cst_267 = arith.constant 0.000000e+00 : f32
    %501 = vector.broadcast %cst_267 : f32 to vector<8x128xf32>
    %502 = arith.select %13, %501, %500 : vector<8x128xi1>, vector<8x128xf32>
    %503 = arith.addf %499, %502 : vector<8x128xf32>
    %c16_i32_268 = arith.constant 16 : i32
    %504 = tpu.dynamic_rotate %503 by %c16_i32_268 dim 1 : vector<8x128xf32>, i32 -> vector<8x128xf32>
    %cst_269 = arith.constant 0.000000e+00 : f32
    %505 = vector.broadcast %cst_269 : f32 to vector<8x128xf32>
    %506 = arith.select %15, %505, %504 : vector<8x128xi1>, vector<8x128xf32>
    %507 = arith.addf %503, %506 : vector<8x128xf32>
    %c32_i32_270 = arith.constant 32 : i32
    %508 = tpu.dynamic_rotate %507 by %c32_i32_270 dim 1 : vector<8x128xf32>, i32 -> vector<8x128xf32>
    %cst_271 = arith.constant 0.000000e+00 : f32
    %509 = vector.broadcast %cst_271 : f32 to vector<8x128xf32>
    %510 = arith.select %17, %509, %508 : vector<8x128xi1>, vector<8x128xf32>
    %511 = arith.addf %507, %510 : vector<8x128xf32>
    %c64_i32_272 = arith.constant 64 : i32
    %512 = tpu.dynamic_rotate %511 by %c64_i32_272 dim 1 : vector<8x128xf32>, i32 -> vector<8x128xf32>
    %cst_273 = arith.constant 0.000000e+00 : f32
    %513 = vector.broadcast %cst_273 : f32 to vector<8x128xf32>
    %514 = arith.select %19, %513, %512 : vector<8x128xi1>, vector<8x128xf32>
    %515 = arith.addf %511, %514 : vector<8x128xf32>
    %c1_i32_274 = arith.constant 1 : i32
    %516 = tpu.dynamic_rotate %515 by %c1_i32_274 dim 1 : vector<8x128xf32>, i32 -> vector<8x128xf32>
    %cst_275 = arith.constant 0.000000e+00 : f32
    %517 = vector.broadcast %cst_275 : f32 to vector<8x128xf32>
    %518 = arith.select %5, %517, %516 : vector<8x128xi1>, vector<8x128xf32>
    %519 = arith.subf %487, %518 : vector<8x128xf32>
    %c1_i32_276 = arith.constant 1 : i32
    %520 = tpu.dynamic_rotate %519 by %c1_i32_276 dim 1 : vector<8x128xf32>, i32 -> vector<8x128xf32>
    %cst_277 = arith.constant 1.000000e+30 : f32
    %521 = vector.broadcast %cst_277 : f32 to vector<8x128xf32>
    %522 = arith.select %7, %521, %520 : vector<8x128xi1>, vector<8x128xf32>
    %523 = arith.minimumf %519, %522 : vector<8x128xf32>
    %c2_i32_278 = arith.constant 2 : i32
    %524 = tpu.dynamic_rotate %523 by %c2_i32_278 dim 1 : vector<8x128xf32>, i32 -> vector<8x128xf32>
    %cst_279 = arith.constant 1.000000e+30 : f32
    %525 = vector.broadcast %cst_279 : f32 to vector<8x128xf32>
    %526 = arith.select %9, %525, %524 : vector<8x128xi1>, vector<8x128xf32>
    %527 = arith.minimumf %523, %526 : vector<8x128xf32>
    %c4_i32_280 = arith.constant 4 : i32
    %528 = tpu.dynamic_rotate %527 by %c4_i32_280 dim 1 : vector<8x128xf32>, i32 -> vector<8x128xf32>
    %cst_281 = arith.constant 1.000000e+30 : f32
    %529 = vector.broadcast %cst_281 : f32 to vector<8x128xf32>
    %530 = arith.select %11, %529, %528 : vector<8x128xi1>, vector<8x128xf32>
    %531 = arith.minimumf %527, %530 : vector<8x128xf32>
    %c8_i32_282 = arith.constant 8 : i32
    %532 = tpu.dynamic_rotate %531 by %c8_i32_282 dim 1 : vector<8x128xf32>, i32 -> vector<8x128xf32>
    %cst_283 = arith.constant 1.000000e+30 : f32
    %533 = vector.broadcast %cst_283 : f32 to vector<8x128xf32>
    %534 = arith.select %13, %533, %532 : vector<8x128xi1>, vector<8x128xf32>
    %535 = arith.minimumf %531, %534 : vector<8x128xf32>
    %c16_i32_284 = arith.constant 16 : i32
    %536 = tpu.dynamic_rotate %535 by %c16_i32_284 dim 1 : vector<8x128xf32>, i32 -> vector<8x128xf32>
    %cst_285 = arith.constant 1.000000e+30 : f32
    %537 = vector.broadcast %cst_285 : f32 to vector<8x128xf32>
    %538 = arith.select %15, %537, %536 : vector<8x128xi1>, vector<8x128xf32>
    %539 = arith.minimumf %535, %538 : vector<8x128xf32>
    %c32_i32_286 = arith.constant 32 : i32
    %540 = tpu.dynamic_rotate %539 by %c32_i32_286 dim 1 : vector<8x128xf32>, i32 -> vector<8x128xf32>
    %cst_287 = arith.constant 1.000000e+30 : f32
    %541 = vector.broadcast %cst_287 : f32 to vector<8x128xf32>
    %542 = arith.select %17, %541, %540 : vector<8x128xi1>, vector<8x128xf32>
    %543 = arith.minimumf %539, %542 : vector<8x128xf32>
    %c64_i32_288 = arith.constant 64 : i32
    %544 = tpu.dynamic_rotate %543 by %c64_i32_288 dim 1 : vector<8x128xf32>, i32 -> vector<8x128xf32>
    %cst_289 = arith.constant 1.000000e+30 : f32
    %545 = vector.broadcast %cst_289 : f32 to vector<8x128xf32>
    %546 = arith.select %19, %545, %544 : vector<8x128xi1>, vector<8x128xf32>
    %547 = arith.minimumf %543, %546 : vector<8x128xf32>
    %548 = arith.addf %515, %547 : vector<8x128xf32>
    %c0_290 = arith.constant 0 : index
    %549 = arith.index_cast %c6_i32 : i32 to index
    %c0_291 = arith.constant 0 : index
    %c0_292 = arith.constant 0 : index
    %550 = vector.load %arg3[%c0_290, %549, %c0_291, %c0_292] : memref<1x8x8x128xf32, #tpu.memory_space<vmem>>, vector<1x1x8x128xf32>
    %551 = vector.shape_cast %550 : vector<1x1x8x128xf32> to vector<8x128xf32>
    %552 = vector.shape_cast %548 : vector<8x128xf32> to vector<1x1x8x128xf32>
    tpu.vector_store %arg3[%c0_290, %549, %c0_291, %c0_292], %552 {strides = array<i32>} : memref<1x8x8x128xf32, #tpu.memory_space<vmem>>, vector<1x1x8x128xf32>,
    %c7_i32 = arith.constant 7 : i32
    %c0_293 = arith.constant 0 : index
    %553 = arith.index_cast %c7_i32 : i32 to index
    %c0_294 = arith.constant 0 : index
    %c0_295 = arith.constant 0 : index
    %554 = vector.load %arg2[%c0_293, %553, %c0_294, %c0_295] : memref<1x8x8x128xf32, #tpu.memory_space<vmem>>, vector<1x1x8x128xf32>
    %555 = vector.shape_cast %554 : vector<1x1x8x128xf32> to vector<8x128xf32>
    %c0_i32_296 = arith.constant 0 : i32
    %556 = arith.cmpi eq, %arg1, %c0_i32_296 : i32
    %c0_i32_297 = arith.constant 0 : i32
    %557 = arith.cmpi eq, %c7_i32, %c0_i32_297 : i32
    %558 = arith.andi %556, %557 : i1
    %cst_298 = arith.constant 0.000000e+00 : f32
    %cst_299 = arith.constant 1.000000e+30 : f32
    %559 = arith.select %558, %cst_298, %cst_299 : f32
    %c1_i32_300 = arith.constant 1 : i32
    %560 = tpu.dynamic_rotate %548 by %c1_i32_300 dim 1 : vector<8x128xf32>, i32 -> vector<8x128xf32>
    %561 = vector.broadcast %559 : f32 to vector<8x128xf32>
    %562 = arith.select %5, %561, %560 : vector<8x128xi1>, vector<8x128xf32>
    %563 = arith.minimumf %548, %562 : vector<8x128xf32>
    %c1_i32_301 = arith.constant 1 : i32
    %564 = tpu.dynamic_rotate %555 by %c1_i32_301 dim 1 : vector<8x128xf32>, i32 -> vector<8x128xf32>
    %cst_302 = arith.constant 0.000000e+00 : f32
    %565 = vector.broadcast %cst_302 : f32 to vector<8x128xf32>
    %566 = arith.select %7, %565, %564 : vector<8x128xi1>, vector<8x128xf32>
    %567 = arith.addf %555, %566 : vector<8x128xf32>
    %c2_i32_303 = arith.constant 2 : i32
    %568 = tpu.dynamic_rotate %567 by %c2_i32_303 dim 1 : vector<8x128xf32>, i32 -> vector<8x128xf32>
    %cst_304 = arith.constant 0.000000e+00 : f32
    %569 = vector.broadcast %cst_304 : f32 to vector<8x128xf32>
    %570 = arith.select %9, %569, %568 : vector<8x128xi1>, vector<8x128xf32>
    %571 = arith.addf %567, %570 : vector<8x128xf32>
    %c4_i32_305 = arith.constant 4 : i32
    %572 = tpu.dynamic_rotate %571 by %c4_i32_305 dim 1 : vector<8x128xf32>, i32 -> vector<8x128xf32>
    %cst_306 = arith.constant 0.000000e+00 : f32
    %573 = vector.broadcast %cst_306 : f32 to vector<8x128xf32>
    %574 = arith.select %11, %573, %572 : vector<8x128xi1>, vector<8x128xf32>
    %575 = arith.addf %571, %574 : vector<8x128xf32>
    %c8_i32_307 = arith.constant 8 : i32
    %576 = tpu.dynamic_rotate %575 by %c8_i32_307 dim 1 : vector<8x128xf32>, i32 -> vector<8x128xf32>
    %cst_308 = arith.constant 0.000000e+00 : f32
    %577 = vector.broadcast %cst_308 : f32 to vector<8x128xf32>
    %578 = arith.select %13, %577, %576 : vector<8x128xi1>, vector<8x128xf32>
    %579 = arith.addf %575, %578 : vector<8x128xf32>
    %c16_i32_309 = arith.constant 16 : i32
    %580 = tpu.dynamic_rotate %579 by %c16_i32_309 dim 1 : vector<8x128xf32>, i32 -> vector<8x128xf32>
    %cst_310 = arith.constant 0.000000e+00 : f32
    %581 = vector.broadcast %cst_310 : f32 to vector<8x128xf32>
    %582 = arith.select %15, %581, %580 : vector<8x128xi1>, vector<8x128xf32>
    %583 = arith.addf %579, %582 : vector<8x128xf32>
    %c32_i32_311 = arith.constant 32 : i32
    %584 = tpu.dynamic_rotate %583 by %c32_i32_311 dim 1 : vector<8x128xf32>, i32 -> vector<8x128xf32>
    %cst_312 = arith.constant 0.000000e+00 : f32
    %585 = vector.broadcast %cst_312 : f32 to vector<8x128xf32>
    %586 = arith.select %17, %585, %584 : vector<8x128xi1>, vector<8x128xf32>
    %587 = arith.addf %583, %586 : vector<8x128xf32>
    %c64_i32_313 = arith.constant 64 : i32
    %588 = tpu.dynamic_rotate %587 by %c64_i32_313 dim 1 : vector<8x128xf32>, i32 -> vector<8x128xf32>
    %cst_314 = arith.constant 0.000000e+00 : f32
    %589 = vector.broadcast %cst_314 : f32 to vector<8x128xf32>
    %590 = arith.select %19, %589, %588 : vector<8x128xi1>, vector<8x128xf32>
    %591 = arith.addf %587, %590 : vector<8x128xf32>
    %c1_i32_315 = arith.constant 1 : i32
    %592 = tpu.dynamic_rotate %591 by %c1_i32_315 dim 1 : vector<8x128xf32>, i32 -> vector<8x128xf32>
    %cst_316 = arith.constant 0.000000e+00 : f32
    %593 = vector.broadcast %cst_316 : f32 to vector<8x128xf32>
    %594 = arith.select %5, %593, %592 : vector<8x128xi1>, vector<8x128xf32>
    %595 = arith.subf %563, %594 : vector<8x128xf32>
    %c1_i32_317 = arith.constant 1 : i32
    %596 = tpu.dynamic_rotate %595 by %c1_i32_317 dim 1 : vector<8x128xf32>, i32 -> vector<8x128xf32>
    %cst_318 = arith.constant 1.000000e+30 : f32
    %597 = vector.broadcast %cst_318 : f32 to vector<8x128xf32>
    %598 = arith.select %7, %597, %596 : vector<8x128xi1>, vector<8x128xf32>
    %599 = arith.minimumf %595, %598 : vector<8x128xf32>
    %c2_i32_319 = arith.constant 2 : i32
    %600 = tpu.dynamic_rotate %599 by %c2_i32_319 dim 1 : vector<8x128xf32>, i32 -> vector<8x128xf32>
    %cst_320 = arith.constant 1.000000e+30 : f32
    %601 = vector.broadcast %cst_320 : f32 to vector<8x128xf32>
    %602 = arith.select %9, %601, %600 : vector<8x128xi1>, vector<8x128xf32>
    %603 = arith.minimumf %599, %602 : vector<8x128xf32>
    %c4_i32_321 = arith.constant 4 : i32
    %604 = tpu.dynamic_rotate %603 by %c4_i32_321 dim 1 : vector<8x128xf32>, i32 -> vector<8x128xf32>
    %cst_322 = arith.constant 1.000000e+30 : f32
    %605 = vector.broadcast %cst_322 : f32 to vector<8x128xf32>
    %606 = arith.select %11, %605, %604 : vector<8x128xi1>, vector<8x128xf32>
    %607 = arith.minimumf %603, %606 : vector<8x128xf32>
    %c8_i32_323 = arith.constant 8 : i32
    %608 = tpu.dynamic_rotate %607 by %c8_i32_323 dim 1 : vector<8x128xf32>, i32 -> vector<8x128xf32>
    %cst_324 = arith.constant 1.000000e+30 : f32
    %609 = vector.broadcast %cst_324 : f32 to vector<8x128xf32>
    %610 = arith.select %13, %609, %608 : vector<8x128xi1>, vector<8x128xf32>
    %611 = arith.minimumf %607, %610 : vector<8x128xf32>
    %c16_i32_325 = arith.constant 16 : i32
    %612 = tpu.dynamic_rotate %611 by %c16_i32_325 dim 1 : vector<8x128xf32>, i32 -> vector<8x128xf32>
    %cst_326 = arith.constant 1.000000e+30 : f32
    %613 = vector.broadcast %cst_326 : f32 to vector<8x128xf32>
    %614 = arith.select %15, %613, %612 : vector<8x128xi1>, vector<8x128xf32>
    %615 = arith.minimumf %611, %614 : vector<8x128xf32>
    %c32_i32_327 = arith.constant 32 : i32
    %616 = tpu.dynamic_rotate %615 by %c32_i32_327 dim 1 : vector<8x128xf32>, i32 -> vector<8x128xf32>
    %cst_328 = arith.constant 1.000000e+30 : f32
    %617 = vector.broadcast %cst_328 : f32 to vector<8x128xf32>
    %618 = arith.select %17, %617, %616 : vector<8x128xi1>, vector<8x128xf32>
    %619 = arith.minimumf %615, %618 : vector<8x128xf32>
    %c64_i32_329 = arith.constant 64 : i32
    %620 = tpu.dynamic_rotate %619 by %c64_i32_329 dim 1 : vector<8x128xf32>, i32 -> vector<8x128xf32>
    %cst_330 = arith.constant 1.000000e+30 : f32
    %621 = vector.broadcast %cst_330 : f32 to vector<8x128xf32>
    %622 = arith.select %19, %621, %620 : vector<8x128xi1>, vector<8x128xf32>
    %623 = arith.minimumf %619, %622 : vector<8x128xf32>
    %624 = arith.addf %591, %623 : vector<8x128xf32>
    %c0_331 = arith.constant 0 : index
    %625 = arith.index_cast %c7_i32 : i32 to index
    %c0_332 = arith.constant 0 : index
    %c0_333 = arith.constant 0 : index
    %626 = vector.load %arg3[%c0_331, %625, %c0_332, %c0_333] : memref<1x8x8x128xf32, #tpu.memory_space<vmem>>, vector<1x1x8x128xf32>
    %627 = vector.shape_cast %626 : vector<1x1x8x128xf32> to vector<8x128xf32>
    %628 = vector.shape_cast %624 : vector<8x128xf32> to vector<1x1x8x128xf32>
    tpu.vector_store %arg3[%c0_331, %625, %c0_332, %c0_333], %628 {strides = array<i32>} : memref<1x8x8x128xf32, #tpu.memory_space<vmem>>, vector<1x1x8x128xf32>,
    %c8_i32_334 = arith.constant 8 : i32
    %c0_335 = arith.constant 0 : index
    %c0_336 = arith.constant 0 : index
    %629 = vector.load %arg4[%c0_335, %c0_336] : memref<8x128xf32, #tpu.memory_space<vmem>>, vector<8x128xf32>
    tpu.vector_store %arg4[%c0_335, %c0_336], %624 {strides = array<i32>} : memref<8x128xf32, #tpu.memory_space<vmem>>, vector<8x128xf32>,
    return
  }
  func.func @transform_0(%arg0: i32, %arg1: i32) -> (i32, i32, i32, i32) {
    %c0_i32 = arith.constant 0 : i32
    %c0_i32_0 = arith.constant 0 : i32
    %c0_i32_1 = arith.constant 0 : i32
    return %arg0, %arg1, %c0_i32, %c0_i32_0 : i32, i32, i32, i32
  }
  func.func @transform_1(%arg0: i32, %arg1: i32) -> (i32, i32, i32, i32) {
    %c0_i32 = arith.constant 0 : i32
    %c0_i32_0 = arith.constant 0 : i32
    %c0_i32_1 = arith.constant 0 : i32
    return %arg0, %arg1, %c0_i32, %c0_i32_0 : i32, i32, i32, i32
  }
}

</mosaic_0001>

<llo_original>
// kernel: tpu_custom_call.1
$region0: #{tpu_custom_call.1}
  #allocation0 [shape = 'u32[]', space=smem, size = 0x4, offset = 0x4, fixed_abs, tag = 'smem constant byte address 0x4 - core index']
  #allocation1 [shape = 'u32[144,128]{1,0:T(1,128)}', space=vmem, size = 0x12000, scoped, tag = 'internal scratch']
  #allocation2 [shape = 'f32[8,128]{1,0:T(8,128)}', space=vmem, size = 0x1000, scoped, tag = 'scratch operand']
  %s0 = inlined_call_operand.hbm [shape: f32[1,8,8,128], index: 0, kind: input, shape index: {}]
  %s1 = inlined_call_operand.hbm [shape: f32[1,8,8,128], index: 1, kind: output, shape index: {}]
  %s2 = sld [smem:[#allocation0]]
  $region22: #{tpu_custom_call.1} parent=0
    _
  %s4 = ssub.s32 1, %s2
  %s5 = scalar_select 0, %s4, %s2
  $region1: #{tpu_custom_call.1} parent=0
    #allocation3 [shape = 'u8[32768]{0}', space=vmem, size = 0x8000, scoped, tag = 'input window, operand 0, single buffered']
    #allocation4 [shape = 's32[1]{0}', space=sflag, size = 0x4, scoped, tag = 'scoped memory for tpu_custom_call.1']
    #allocation5 [shape = 's32[1]{0}', space=sflag, size = 0x4, scoped, tag = 'scoped memory for tpu_custom_call.1']
    #allocation6 [shape = 'u8[32768]{0}', space=vmem, size = 0x8000, scoped, tag = 'output window, operand 0, single buffered']
    %6 = vsyncpa [#allocation4], 0
    %7 = vsyncpa [#allocation5], 0
    // Predicated region
    $region2: #{tpu_custom_call.1} parent=1 // pred_check
      _
    $region3: #{tpu_custom_call.1} parent=1 // pred_check_branch
      %9 = sbr.rel (0) target = $region5
    $region4: #{tpu_custom_call.1} parent=1 // pred_region
      %s11 = ssub.s32 1024, 1024
      %12 = vsyncadd [#allocation4], %s11
      %s13 = sshll.u32 [#allocation3], 4
      %s14 = int_to_ptr.vmem [resolvable:$true] %s13
      %19 = dma.hbm_to_vmem [thread:$0]  %s0, 1024, %s14, [#allocation4], 128, 128, 8
    $region5: #{tpu_custom_call.1} parent=1 // pred_fallthru
      _
    // Predicated region
    $region6: #{tpu_custom_call.1} parent=1 // pred_check
      _
    $region7: #{tpu_custom_call.1} parent=1 // pred_check_branch
      %21 = sbr.rel (0) target = $region9
    $region8: #{tpu_custom_call.1} parent=1 // pred_region
      %22 = dma.done [#allocation4], 1024
    $region9: #{tpu_custom_call.1} parent=1 // pred_fallthru
      _
    %p23 = scmp.eq.s32.totalorder 0, 0
    // Predicated region
    $region10: #{tpu_custom_call.1} parent=1 // pred_check
      %p24 = pneg %p23
    $region11: #{tpu_custom_call.1} parent=1 // pred_check_branch
      %26 = sbr.rel (%p24) target = $region13
    $region12: #{tpu_custom_call.1} parent=1 // pred_region
      %27 = vst [vmem:[#allocation2] sm:$0xff] 1e+30
    $region13: #{tpu_custom_call.1} parent=1 // pred_fallthru
      _
    %v28 = vlaneseq
    %v29 = vand.u32 %v28, 127
    %vm30 = vcmp.lt.s32.totalorder %v29, 1
    %vm31 = vcmp.lt.s32.totalorder %v29, 2
    %vm32 = vcmp.lt.s32.totalorder %v29, 4
    %vm33 = vcmp.lt.s32.totalorder %v29, 8
    %vm34 = vcmp.lt.s32.totalorder %v29, 16
    %vm35 = vcmp.lt.s32.totalorder %v29, 32
    %vm36 = vcmp.lt.s32.totalorder %v29, 64
    %v37 = vld [vmem:[#allocation2] sm:$0xff]
    %v38 = vld [vmem:[#allocation3] sm:$0xff]
    %s39 = scalar_select %p23, 0.0, 1e+30
    %40 = vrot.lane.b32.xlu0 %v37, 1
    %v41 = vpop.permute.xlu0 %40
    %v42 = vstv %s39
    %v43 = vsel %vm30, %v42, %v41
    %v44 = vmin.f32 %v37, %v43
    %45 = vrot.lane.b32.xlu0 %v38, 1
    %v46 = vpop.permute.xlu0 %45
    %v47 = vsel %vm30, 0.0, %v46
    %v48 = vadd.f32 %v38, %v47
    %49 = vrot.lane.b32.xlu0 %v48, 2
    %v50 = vpop.permute.xlu0 %49
    %v51 = vsel %vm31, 0.0, %v50
    %v52 = vadd.f32 %v48, %v51
    %53 = vrot.lane.b32.xlu0 %v52, 4
    %v54 = vpop.permute.xlu0 %53
    %v55 = vsel %vm32, 0.0, %v54
    %v56 = vadd.f32 %v52, %v55
    %57 = vrot.lane.b32.xlu0 %v56, 8
    %v58 = vpop.permute.xlu0 %57
    %v59 = vsel %vm33, 0.0, %v58
    %v60 = vadd.f32 %v56, %v59
    %61 = vrot.lane.b32.xlu0 %v60, 16
    %v62 = vpop.permute.xlu0 %61
    %v63 = vsel %vm34, 0.0, %v62
    %v64 = vadd.f32 %v60, %v63
    %65 = vrot.lane.b32.xlu0 %v64, 32
    %v66 = vpop.permute.xlu0 %65
    %v67 = vsel %vm35, 0.0, %v66
    %v68 = vadd.f32 %v64, %v67
    %69 = vrot.lane.b32.xlu0 %v68, 64
    %v70 = vpop.permute.xlu0 %69
    %v71 = vsel %vm36, 0.0, %v70
    %v72 = vadd.f32 %v68, %v71
    %73 = vrot.lane.b32.xlu0 %v72, 1
    %v74 = vpop.permute.xlu0 %73
    %v75 = vsel %vm30, 0.0, %v74
    %v76 = vsub.f32 %v44, %v75
    %77 = vrot.lane.b32.xlu0 %v76, 1
    %v78 = vpop.permute.xlu0 %77
    %v79 = vsel %vm30, 1e+30, %v78
    %v80 = vmin.f32 %v76, %v79
    %81 = vrot.lane.b32.xlu0 %v80, 2
    %v82 = vpop.permute.xlu0 %81
    %v83 = vsel %vm31, 1e+30, %v82
    %v84 = vmin.f32 %v80, %v83
    %85 = vrot.lane.b32.xlu0 %v84, 4
    %v86 = vpop.permute.xlu0 %85
    %v87 = vsel %vm32, 1e+30, %v86
    %v88 = vmin.f32 %v84, %v87
    %89 = vrot.lane.b32.xlu0 %v88, 8
    %v90 = vpop.permute.xlu0 %89
    %v91 = vsel %vm33, 1e+30, %v90
    %v92 = vmin.f32 %v88, %v91
    %93 = vrot.lane.b32.xlu0 %v92, 16
    %v94 = vpop.permute.xlu0 %93
    %v95 = vsel %vm34, 1e+30, %v94
    %v96 = vmin.f32 %v92, %v95
    %97 = vrot.lane.b32.xlu0 %v96, 32
    %v98 = vpop.permute.xlu0 %97
    %v99 = vsel %vm35, 1e+30, %v98
    %v100 = vmin.f32 %v96, %v99
    %101 = vrot.lane.b32.xlu0 %v100, 64
    %v102 = vpop.permute.xlu0 %101
    %v103 = vsel %vm36, 1e+30, %v102
    %v104 = vmin.f32 %v100, %v103
    %v105 = vadd.f32 %v72, %v104
    %106 = vst [vmem:[#allocation6] sm:$0xff] %v105
    %s107 = scalar_lea.vmem [#allocation3], 8
    %v108 = vld [vmem:[%s107] sm:$0xff]
    %109 = vrot.lane.b32.xlu0 %v105, 1
    %v110 = vpop.permute.xlu0 %109
    %v111 = vsel %vm30, 1e+30, %v110
    %v112 = vmin.f32 %v105, %v111
    %113 = vrot.lane.b32.xlu0 %v108, 1
    %v114 = vpop.permute.xlu0 %113
    %v115 = vsel %vm30, 0.0, %v114
    %v116 = vadd.f32 %v108, %v115
    %117 = vrot.lane.b32.xlu0 %v116, 2
    %v118 = vpop.permute.xlu0 %117
    %v119 = vsel %vm31, 0.0, %v118
    %v120 = vadd.f32 %v116, %v119
    %121 = vrot.lane.b32.xlu0 %v120, 4
    %v122 = vpop.permute.xlu0 %121
    %v123 = vsel %vm32, 0.0, %v122
    %v124 = vadd.f32 %v120, %v123
    %125 = vrot.lane.b32.xlu0 %v124, 8
    %v126 = vpop.permute.xlu0 %125
    %v127 = vsel %vm33, 0.0, %v126
    %v128 = vadd.f32 %v124, %v127
    %129 = vrot.lane.b32.xlu0 %v128, 16
    %v130 = vpop.permute.xlu0 %129
    %v131 = vsel %vm34, 0.0, %v130
    %v132 = vadd.f32 %v128, %v131
    %133 = vrot.lane.b32.xlu0 %v132, 32
    %v134 = vpop.permute.xlu0 %133
    %v135 = vsel %vm35, 0.0, %v134
    %v136 = vadd.f32 %v132, %v135
    %137 = vrot.lane.b32.xlu0 %v136, 64
    %v138 = vpop.permute.xlu0 %137
    %v139 = vsel %vm36, 0.0, %v138
    %v140 = vadd.f32 %v136, %v139
    %141 = vrot.lane.b32.xlu0 %v140, 1
    %v142 = vpop.permute.xlu0 %141
    %v143 = vsel %vm30, 0.0, %v142
    %v144 = vsub.f32 %v112, %v143
    %145 = vrot.lane.b32.xlu0 %v144, 1
    %v146 = vpop.permute.xlu0 %145
    %v147 = vsel %vm30, 1e+30, %v146
    %v148 = vmin.f32 %v144, %v147
    %149 = vrot.lane.b32.xlu0 %v148, 2
    %v150 = vpop.permute.xlu0 %149
    %v151 = vsel %vm31, 1e+30, %v150
    %v152 = vmin.f32 %v148, %v151
    %153 = vrot.lane.b32.xlu0 %v152, 4
    %v154 = vpop.permute.xlu0 %153
    %v155 = vsel %vm32, 1e+30, %v154
    %v156 = vmin.f32 %v152, %v155
    %157 = vrot.lane.b32.xlu0 %v156, 8
    %v158 = vpop.permute.xlu0 %157
    %v159 = vsel %vm33, 1e+30, %v158
    %v160 = vmin.f32 %v156, %v159
    %161 = vrot.lane.b32.xlu0 %v160, 16
    %v162 = vpop.permute.xlu0 %161
    %v163 = vsel %vm34, 1e+30, %v162
    %v164 = vmin.f32 %v160, %v163
    %165 = vrot.lane.b32.xlu0 %v164, 32
    %v166 = vpop.permute.xlu0 %165
    %v167 = vsel %vm35, 1e+30, %v166
    %v168 = vmin.f32 %v164, %v167
    %169 = vrot.lane.b32.xlu0 %v168, 64
    %v170 = vpop.permute.xlu0 %169
    %v171 = vsel %vm36, 1e+30, %v170
    %v172 = vmin.f32 %v168, %v171
    %v173 = vadd.f32 %v140, %v172
    %s174 = scalar_lea.vmem [#allocation6], 8
    %175 = vst [vmem:[%s174] sm:$0xff] %v173
    %s176 = scalar_lea.vmem [#allocation3], 16
    %v177 = vld [vmem:[%s176] sm:$0xff]
    %178 = vrot.lane.b32.xlu0 %v173, 1
    %v179 = vpop.permute.xlu0 %178
    %v180 = vsel %vm30, 1e+30, %v179
    %v181 = vmin.f32 %v173, %v180
    %182 = vrot.lane.b32.xlu0 %v177, 1
    %v183 = vpop.permute.xlu0 %182
    %v184 = vsel %vm30, 0.0, %v183
    %v185 = vadd.f32 %v177, %v184
    %186 = vrot.lane.b32.xlu0 %v185, 2
    %v187 = vpop.permute.xlu0 %186
    %v188 = vsel %vm31, 0.0, %v187
    %v189 = vadd.f32 %v185, %v188
    %190 = vrot.lane.b32.xlu0 %v189, 4
    %v191 = vpop.permute.xlu0 %190
    %v192 = vsel %vm32, 0.0, %v191
    %v193 = vadd.f32 %v189, %v192
    %194 = vrot.lane.b32.xlu0 %v193, 8
    %v195 = vpop.permute.xlu0 %194
    %v196 = vsel %vm33, 0.0, %v195
    %v197 = vadd.f32 %v193, %v196
    %198 = vrot.lane.b32.xlu0 %v197, 16
    %v199 = vpop.permute.xlu0 %198
    %v200 = vsel %vm34, 0.0, %v199
    %v201 = vadd.f32 %v197, %v200
    %202 = vrot.lane.b32.xlu0 %v201, 32
    %v203 = vpop.permute.xlu0 %202
    %v204 = vsel %vm35, 0.0, %v203
    %v205 = vadd.f32 %v201, %v204
    %206 = vrot.lane.b32.xlu0 %v205, 64
    %v207 = vpop.permute.xlu0 %206
    %v208 = vsel %vm36, 0.0, %v207
    %v209 = vadd.f32 %v205, %v208
    %210 = vrot.lane.b32.xlu0 %v209, 1
    %v211 = vpop.permute.xlu0 %210
    %v212 = vsel %vm30, 0.0, %v211
    %v213 = vsub.f32 %v181, %v212
    %214 = vrot.lane.b32.xlu0 %v213, 1
    %v215 = vpop.permute.xlu0 %214
    %v216 = vsel %vm30, 1e+30, %v215
    %v217 = vmin.f32 %v213, %v216
    %218 = vrot.lane.b32.xlu0 %v217, 2
    %v219 = vpop.permute.xlu0 %218
    %v220 = vsel %vm31, 1e+30, %v219
    %v221 = vmin.f32 %v217, %v220
    %222 = vrot.lane.b32.xlu0 %v221, 4
    %v223 = vpop.permute.xlu0 %222
    %v224 = vsel %vm32, 1e+30, %v223
    %v225 = vmin.f32 %v221, %v224
    %226 = vrot.lane.b32.xlu0 %v225, 8
    %v227 = vpop.permute.xlu0 %226
    %v228 = vsel %vm33, 1e+30, %v227
    %v229 = vmin.f32 %v225, %v228
    %230 = vrot.lane.b32.xlu0 %v229, 16
    %v231 = vpop.permute.xlu0 %230
    %v232 = vsel %vm34, 1e+30, %v231
    %v233 = vmin.f32 %v229, %v232
    %234 = vrot.lane.b32.xlu0 %v233, 32
    %v235 = vpop.permute.xlu0 %234
    %v236 = vsel %vm35, 1e+30, %v235
    %v237 = vmin.f32 %v233, %v236
    %238 = vrot.lane.b32.xlu0 %v237, 64
    %v239 = vpop.permute.xlu0 %238
    %v240 = vsel %vm36, 1e+30, %v239
    %v241 = vmin.f32 %v237, %v240
    %v242 = vadd.f32 %v209, %v241
    %s243 = scalar_lea.vmem [#allocation6], 16
    %244 = vst [vmem:[%s243] sm:$0xff] %v242
    %s245 = scalar_lea.vmem [#allocation3], 24
    %v246 = vld [vmem:[%s245] sm:$0xff]
    %247 = vrot.lane.b32.xlu0 %v242, 1
    %v248 = vpop.permute.xlu0 %247
    %v249 = vsel %vm30, 1e+30, %v248
    %v250 = vmin.f32 %v242, %v249
    %251 = vrot.lane.b32.xlu0 %v246, 1
    %v252 = vpop.permute.xlu0 %251
    %v253 = vsel %vm30, 0.0, %v252
    %v254 = vadd.f32 %v246, %v253
    %255 = vrot.lane.b32.xlu0 %v254, 2
    %v256 = vpop.permute.xlu0 %255
    %v257 = vsel %vm31, 0.0, %v256
    %v258 = vadd.f32 %v254, %v257
    %259 = vrot.lane.b32.xlu0 %v258, 4
    %v260 = vpop.permute.xlu0 %259
    %v261 = vsel %vm32, 0.0, %v260
    %v262 = vadd.f32 %v258, %v261
    %263 = vrot.lane.b32.xlu0 %v262, 8
    %v264 = vpop.permute.xlu0 %263
    %v265 = vsel %vm33, 0.0, %v264
    %v266 = vadd.f32 %v262, %v265
    %267 = vrot.lane.b32.xlu0 %v266, 16
    %v268 = vpop.permute.xlu0 %267
    %v269 = vsel %vm34, 0.0, %v268
    %v270 = vadd.f32 %v266, %v269
    %271 = vrot.lane.b32.xlu0 %v270, 32
    %v272 = vpop.permute.xlu0 %271
    %v273 = vsel %vm35, 0.0, %v272
    %v274 = vadd.f32 %v270, %v273
    %275 = vrot.lane.b32.xlu0 %v274, 64
    %v276 = vpop.permute.xlu0 %275
    %v277 = vsel %vm36, 0.0, %v276
    %v278 = vadd.f32 %v274, %v277
    %279 = vrot.lane.b32.xlu0 %v278, 1
    %v280 = vpop.permute.xlu0 %279
    %v281 = vsel %vm30, 0.0, %v280
    %v282 = vsub.f32 %v250, %v281
    %283 = vrot.lane.b32.xlu0 %v282, 1
    %v284 = vpop.permute.xlu0 %283
    %v285 = vsel %vm30, 1e+30, %v284
    %v286 = vmin.f32 %v282, %v285
    %287 = vrot.lane.b32.xlu0 %v286, 2
    %v288 = vpop.permute.xlu0 %287
    %v289 = vsel %vm31, 1e+30, %v288
    %v290 = vmin.f32 %v286, %v289
    %291 = vrot.lane.b32.xlu0 %v290, 4
    %v292 = vpop.permute.xlu0 %291
    %v293 = vsel %vm32, 1e+30, %v292
    %v294 = vmin.f32 %v290, %v293
    %295 = vrot.lane.b32.xlu0 %v294, 8
    %v296 = vpop.permute.xlu0 %295
    %v297 = vsel %vm33, 1e+30, %v296
    %v298 = vmin.f32 %v294, %v297
    %299 = vrot.lane.b32.xlu0 %v298, 16
    %v300 = vpop.permute.xlu0 %299
    %v301 = vsel %vm34, 1e+30, %v300
    %v302 = vmin.f32 %v298, %v301
    %303 = vrot.lane.b32.xlu0 %v302, 32
    %v304 = vpop.permute.xlu0 %303
    %v305 = vsel %vm35, 1e+30, %v304
    %v306 = vmin.f32 %v302, %v305
    %307 = vrot.lane.b32.xlu0 %v306, 64
    %v308 = vpop.permute.xlu0 %307
    %v309 = vsel %vm36, 1e+30, %v308
    %v310 = vmin.f32 %v306, %v309
    %v311 = vadd.f32 %v278, %v310
    %s312 = scalar_lea.vmem [#allocation6], 24
    %313 = vst [vmem:[%s312] sm:$0xff] %v311
    %s314 = scalar_lea.vmem [#allocation3], 32
    %v315 = vld [vmem:[%s314] sm:$0xff]
    %316 = vrot.lane.b32.xlu0 %v311, 1
    %v317 = vpop.permute.xlu0 %316
    %v318 = vsel %vm30, 1e+30, %v317
    %v319 = vmin.f32 %v311, %v318
    %320 = vrot.lane.b32.xlu0 %v315, 1
    %v321 = vpop.permute.xlu0 %320
    %v322 = vsel %vm30, 0.0, %v321
    %v323 = vadd.f32 %v315, %v322
    %324 = vrot.lane.b32.xlu0 %v323, 2
    %v325 = vpop.permute.xlu0 %324
    %v326 = vsel %vm31, 0.0, %v325
    %v327 = vadd.f32 %v323, %v326
    %328 = vrot.lane.b32.xlu0 %v327, 4
    %v329 = vpop.permute.xlu0 %328
    %v330 = vsel %vm32, 0.0, %v329
    %v331 = vadd.f32 %v327, %v330
    %332 = vrot.lane.b32.xlu0 %v331, 8
    %v333 = vpop.permute.xlu0 %332
    %v334 = vsel %vm33, 0.0, %v333
    %v335 = vadd.f32 %v331, %v334
    %336 = vrot.lane.b32.xlu0 %v335, 16
    %v337 = vpop.permute.xlu0 %336
    %v338 = vsel %vm34, 0.0, %v337
    %v339 = vadd.f32 %v335, %v338
    %340 = vrot.lane.b32.xlu0 %v339, 32
    %v341 = vpop.permute.xlu0 %340
    %v342 = vsel %vm35, 0.0, %v341
    %v343 = vadd.f32 %v339, %v342
    %344 = vrot.lane.b32.xlu0 %v343, 64
    %v345 = vpop.permute.xlu0 %344
    %v346 = vsel %vm36, 0.0, %v345
    %v347 = vadd.f32 %v343, %v346
    %348 = vrot.lane.b32.xlu0 %v347, 1
    %v349 = vpop.permute.xlu0 %348
    %v350 = vsel %vm30, 0.0, %v349
    %v351 = vsub.f32 %v319, %v350
    %352 = vrot.lane.b32.xlu0 %v351, 1
    %v353 = vpop.permute.xlu0 %352
    %v354 = vsel %vm30, 1e+30, %v353
    %v355 = vmin.f32 %v351, %v354
    %356 = vrot.lane.b32.xlu0 %v355, 2
    %v357 = vpop.permute.xlu0 %356
    %v358 = vsel %vm31, 1e+30, %v357
    %v359 = vmin.f32 %v355, %v358
    %360 = vrot.lane.b32.xlu0 %v359, 4
    %v361 = vpop.permute.xlu0 %360
    %v362 = vsel %vm32, 1e+30, %v361
    %v363 = vmin.f32 %v359, %v362
    %364 = vrot.lane.b32.xlu0 %v363, 8
    %v365 = vpop.permute.xlu0 %364
    %v366 = vsel %vm33, 1e+30, %v365
    %v367 = vmin.f32 %v363, %v366
    %368 = vrot.lane.b32.xlu0 %v367, 16
    %v369 = vpop.permute.xlu0 %368
    %v370 = vsel %vm34, 1e+30, %v369
    %v371 = vmin.f32 %v367, %v370
    %372 = vrot.lane.b32.xlu0 %v371, 32
    %v373 = vpop.permute.xlu0 %372
    %v374 = vsel %vm35, 1e+30, %v373
    %v375 = vmin.f32 %v371, %v374
    %376 = vrot.lane.b32.xlu0 %v375, 64
    %v377 = vpop.permute.xlu0 %376
    %v378 = vsel %vm36, 1e+30, %v377
    %v379 = vmin.f32 %v375, %v378
    %v380 = vadd.f32 %v347, %v379
    %s381 = scalar_lea.vmem [#allocation6], 32
    %382 = vst [vmem:[%s381] sm:$0xff] %v380
    %s383 = scalar_lea.vmem [#allocation3], 40
    %v384 = vld [vmem:[%s383] sm:$0xff]
    %385 = vrot.lane.b32.xlu0 %v380, 1
    %v386 = vpop.permute.xlu0 %385
    %v387 = vsel %vm30, 1e+30, %v386
    %v388 = vmin.f32 %v380, %v387
    %389 = vrot.lane.b32.xlu0 %v384, 1
    %v390 = vpop.permute.xlu0 %389
    %v391 = vsel %vm30, 0.0, %v390
    %v392 = vadd.f32 %v384, %v391
    %393 = vrot.lane.b32.xlu0 %v392, 2
    %v394 = vpop.permute.xlu0 %393
    %v395 = vsel %vm31, 0.0, %v394
    %v396 = vadd.f32 %v392, %v395
    %397 = vrot.lane.b32.xlu0 %v396, 4
    %v398 = vpop.permute.xlu0 %397
    %v399 = vsel %vm32, 0.0, %v398
    %v400 = vadd.f32 %v396, %v399
    %401 = vrot.lane.b32.xlu0 %v400, 8
    %v402 = vpop.permute.xlu0 %401
    %v403 = vsel %vm33, 0.0, %v402
    %v404 = vadd.f32 %v400, %v403
    %405 = vrot.lane.b32.xlu0 %v404, 16
    %v406 = vpop.permute.xlu0 %405
    %v407 = vsel %vm34, 0.0, %v406
    %v408 = vadd.f32 %v404, %v407
    %409 = vrot.lane.b32.xlu0 %v408, 32
    %v410 = vpop.permute.xlu0 %409
    %v411 = vsel %vm35, 0.0, %v410
    %v412 = vadd.f32 %v408, %v411
    %413 = vrot.lane.b32.xlu0 %v412, 64
    %v414 = vpop.permute.xlu0 %413
    %v415 = vsel %vm36, 0.0, %v414
    %v416 = vadd.f32 %v412, %v415
    %417 = vrot.lane.b32.xlu0 %v416, 1
    %v418 = vpop.permute.xlu0 %417
    %v419 = vsel %vm30, 0.0, %v418
    %v420 = vsub.f32 %v388, %v419
    %421 = vrot.lane.b32.xlu0 %v420, 1
    %v422 = vpop.permute.xlu0 %421
    %v423 = vsel %vm30, 1e+30, %v422
    %v424 = vmin.f32 %v420, %v423
    %425 = vrot.lane.b32.xlu0 %v424, 2
    %v426 = vpop.permute.xlu0 %425
    %v427 = vsel %vm31, 1e+30, %v426
    %v428 = vmin.f32 %v424, %v427
    %429 = vrot.lane.b32.xlu0 %v428, 4
    %v430 = vpop.permute.xlu0 %429
    %v431 = vsel %vm32, 1e+30, %v430
    %v432 = vmin.f32 %v428, %v431
    %433 = vrot.lane.b32.xlu0 %v432, 8
    %v434 = vpop.permute.xlu0 %433
    %v435 = vsel %vm33, 1e+30, %v434
    %v436 = vmin.f32 %v432, %v435
    %437 = vrot.lane.b32.xlu0 %v436, 16
    %v438 = vpop.permute.xlu0 %437
    %v439 = vsel %vm34, 1e+30, %v438
    %v440 = vmin.f32 %v436, %v439
    %441 = vrot.lane.b32.xlu0 %v440, 32
    %v442 = vpop.permute.xlu0 %441
    %v443 = vsel %vm35, 1e+30, %v442
    %v444 = vmin.f32 %v440, %v443
    %445 = vrot.lane.b32.xlu0 %v444, 64
    %v446 = vpop.permute.xlu0 %445
    %v447 = vsel %vm36, 1e+30, %v446
    %v448 = vmin.f32 %v444, %v447
    %v449 = vadd.f32 %v416, %v448
    %s450 = scalar_lea.vmem [#allocation6], 40
    %451 = vst [vmem:[%s450] sm:$0xff] %v449
    %s452 = scalar_lea.vmem [#allocation3], 48
    %v453 = vld [vmem:[%s452] sm:$0xff]
    %454 = vrot.lane.b32.xlu0 %v449, 1
    %v455 = vpop.permute.xlu0 %454
    %v456 = vsel %vm30, 1e+30, %v455
    %v457 = vmin.f32 %v449, %v456
    %458 = vrot.lane.b32.xlu0 %v453, 1
    %v459 = vpop.permute.xlu0 %458
    %v460 = vsel %vm30, 0.0, %v459
    %v461 = vadd.f32 %v453, %v460
    %462 = vrot.lane.b32.xlu0 %v461, 2
    %v463 = vpop.permute.xlu0 %462
    %v464 = vsel %vm31, 0.0, %v463
    %v465 = vadd.f32 %v461, %v464
    %466 = vrot.lane.b32.xlu0 %v465, 4
    %v467 = vpop.permute.xlu0 %466
    %v468 = vsel %vm32, 0.0, %v467
    %v469 = vadd.f32 %v465, %v468
    %470 = vrot.lane.b32.xlu0 %v469, 8
    %v471 = vpop.permute.xlu0 %470
    %v472 = vsel %vm33, 0.0, %v471
    %v473 = vadd.f32 %v469, %v472
    %474 = vrot.lane.b32.xlu0 %v473, 16
    %v475 = vpop.permute.xlu0 %474
    %v476 = vsel %vm34, 0.0, %v475
    %v477 = vadd.f32 %v473, %v476
    %478 = vrot.lane.b32.xlu0 %v477, 32
    %v479 = vpop.permute.xlu0 %478
    %v480 = vsel %vm35, 0.0, %v479
    %v481 = vadd.f32 %v477, %v480
    %482 = vrot.lane.b32.xlu0 %v481, 64
    %v483 = vpop.permute.xlu0 %482
    %v484 = vsel %vm36, 0.0, %v483
    %v485 = vadd.f32 %v481, %v484
    %486 = vrot.lane.b32.xlu0 %v485, 1
    %v487 = vpop.permute.xlu0 %486
    %v488 = vsel %vm30, 0.0, %v487
    %v489 = vsub.f32 %v457, %v488
    %490 = vrot.lane.b32.xlu0 %v489, 1
    %v491 = vpop.permute.xlu0 %490
    %v492 = vsel %vm30, 1e+30, %v491
    %v493 = vmin.f32 %v489, %v492
    %494 = vrot.lane.b32.xlu0 %v493, 2
    %v495 = vpop.permute.xlu0 %494
    %v496 = vsel %vm31, 1e+30, %v495
    %v497 = vmin.f32 %v493, %v496
    %498 = vrot.lane.b32.xlu0 %v497, 4
    %v499 = vpop.permute.xlu0 %498
    %v500 = vsel %vm32, 1e+30, %v499
    %v501 = vmin.f32 %v497, %v500
    %502 = vrot.lane.b32.xlu0 %v501, 8
    %v503 = vpop.permute.xlu0 %502
    %v504 = vsel %vm33, 1e+30, %v503
    %v505 = vmin.f32 %v501, %v504
    %506 = vrot.lane.b32.xlu0 %v505, 16
    %v507 = vpop.permute.xlu0 %506
    %v508 = vsel %vm34, 1e+30, %v507
    %v509 = vmin.f32 %v505, %v508
    %510 = vrot.lane.b32.xlu0 %v509, 32
    %v511 = vpop.permute.xlu0 %510
    %v512 = vsel %vm35, 1e+30, %v511
    %v513 = vmin.f32 %v509, %v512
    %514 = vrot.lane.b32.xlu0 %v513, 64
    %v515 = vpop.permute.xlu0 %514
    %v516 = vsel %vm36, 1e+30, %v515
    %v517 = vmin.f32 %v513, %v516
    %v518 = vadd.f32 %v485, %v517
    %s519 = scalar_lea.vmem [#allocation6], 48
    %520 = vst [vmem:[%s519] sm:$0xff] %v518
    %s521 = scalar_lea.vmem [#allocation3], 56
    %v522 = vld [vmem:[%s521] sm:$0xff]
    %523 = vrot.lane.b32.xlu0 %v518, 1
    %v524 = vpop.permute.xlu0 %523
    %v525 = vsel %vm30, 1e+30, %v524
    %v526 = vmin.f32 %v518, %v525
    %527 = vrot.lane.b32.xlu0 %v522, 1
    %v528 = vpop.permute.xlu0 %527
    %v529 = vsel %vm30, 0.0, %v528
    %v530 = vadd.f32 %v522, %v529
    %531 = vrot.lane.b32.xlu0 %v530, 2
    %v532 = vpop.permute.xlu0 %531
    %v533 = vsel %vm31, 0.0, %v532
    %v534 = vadd.f32 %v530, %v533
    %535 = vrot.lane.b32.xlu0 %v534, 4
    %v536 = vpop.permute.xlu0 %535
    %v537 = vsel %vm32, 0.0, %v536
    %v538 = vadd.f32 %v534, %v537
    %539 = vrot.lane.b32.xlu0 %v538, 8
    %v540 = vpop.permute.xlu0 %539
    %v541 = vsel %vm33, 0.0, %v540
    %v542 = vadd.f32 %v538, %v541
    %543 = vrot.lane.b32.xlu0 %v542, 16
    %v544 = vpop.permute.xlu0 %543
    %v545 = vsel %vm34, 0.0, %v544
    %v546 = vadd.f32 %v542, %v545
    %547 = vrot.lane.b32.xlu0 %v546, 32
    %v548 = vpop.permute.xlu0 %547
    %v549 = vsel %vm35, 0.0, %v548
    %v550 = vadd.f32 %v546, %v549
    %551 = vrot.lane.b32.xlu0 %v550, 64
    %v552 = vpop.permute.xlu0 %551
    %v553 = vsel %vm36, 0.0, %v552
    %v554 = vadd.f32 %v550, %v553
    %555 = vrot.lane.b32.xlu0 %v554, 1
    %v556 = vpop.permute.xlu0 %555
    %v557 = vsel %vm30, 0.0, %v556
    %v558 = vsub.f32 %v526, %v557
    %559 = vrot.lane.b32.xlu0 %v558, 1
    %v560 = vpop.permute.xlu0 %559
    %v561 = vsel %vm30, 1e+30, %v560
    %v562 = vmin.f32 %v558, %v561
    %563 = vrot.lane.b32.xlu0 %v562, 2
    %v564 = vpop.permute.xlu0 %563
    %v565 = vsel %vm31, 1e+30, %v564
    %v566 = vmin.f32 %v562, %v565
    %567 = vrot.lane.b32.xlu0 %v566, 4
    %v568 = vpop.permute.xlu0 %567
    %v569 = vsel %vm32, 1e+30, %v568
    %v570 = vmin.f32 %v566, %v569
    %571 = vrot.lane.b32.xlu0 %v570, 8
    %v572 = vpop.permute.xlu0 %571
    %v573 = vsel %vm33, 1e+30, %v572
    %v574 = vmin.f32 %v570, %v573
    %575 = vrot.lane.b32.xlu0 %v574, 16
    %v576 = vpop.permute.xlu0 %575
    %v577 = vsel %vm34, 1e+30, %v576
    %v578 = vmin.f32 %v574, %v577
    %579 = vrot.lane.b32.xlu0 %v578, 32
    %v580 = vpop.permute.xlu0 %579
    %v581 = vsel %vm35, 1e+30, %v580
    %v582 = vmin.f32 %v578, %v581
    %583 = vrot.lane.b32.xlu0 %v582, 64
    %v584 = vpop.permute.xlu0 %583
    %v585 = vsel %vm36, 1e+30, %v584
    %v586 = vmin.f32 %v582, %v585
    %v587 = vadd.f32 %v554, %v586
    %s588 = scalar_lea.vmem [#allocation6], 56
    %589 = vst [vmem:[%s588] sm:$0xff] %v587
    %590 = vst [vmem:[#allocation2] sm:$0xff] %v587
    // Predicated region
    $region14: #{tpu_custom_call.1} parent=1 // pred_check
      _
    $region15: #{tpu_custom_call.1} parent=1 // pred_check_branch
      %592 = sbr.rel (0) target = $region17
    $region16: #{tpu_custom_call.1} parent=1 // pred_region
      %s594 = ssub.s32 1024, 1024
      %595 = vsyncadd [#allocation5], %s594
      %s596 = sshll.u32 [#allocation6], 4
      %s597 = int_to_ptr.vmem [resolvable:$true] %s596
      %602 = dma.vmem_to_hbm [thread:$0]  %s597, 1024, %s1, [#allocation5], 128, 128, 8
    $region17: #{tpu_custom_call.1} parent=1 // pred_fallthru
      _
    // Predicated region
    $region18: #{tpu_custom_call.1} parent=1 // pred_check
      _
    $region19: #{tpu_custom_call.1} parent=1 // pred_check_branch
      %604 = sbr.rel (0) target = $region21
    $region20: #{tpu_custom_call.1} parent=1 // pred_region
      %605 = dma.done [#allocation5], 1024
    $region21: #{tpu_custom_call.1} parent=1 // pred_fallthru
      _
    %606 = vsyncpa [#allocation4], 1
    %607 = vsyncpa [#allocation5], 1

</llo_original>
